<compile_context>
chip_gen: v5e
topology: v5e:2x2
jax: 0.10.0
libtpu: 0.0.40
codegen_flags: <defaults>
</compile_context>

<pallas_src>
import functools

import jax
import jax.numpy as jnp
import numpy as np
from jax.experimental import pallas as pl
from jax.experimental.pallas import tpu as pltpu


# ----------------------------------------------------------------------------
# Pallas kernel
# ----------------------------------------------------------------------------
def _band_conv(pad_ref, wb_ref, bias, N, H, kw, cw):
    """3x3 'same' conv in the lane-packed (W*C) layout.

    pad_ref: (N, H+2, kw) f32 scratch with zero halo rows, kw = W*Cin.
    wb_ref:  (3, kw, cw) bf16 block-banded weights (kx taps + Cin folded into K,
             horizontal zero-padding encoded as zero blocks).
    bias:    (1, cw) f32 (already tiled over W).
    Returns  (N*H, cw) f32.
    """
    acc = jnp.zeros((N * H, cw), jnp.float32)
    for ky in range(3):  # only the vertical tap stays a loop: 3 dense matmuls
        patch = pad_ref[:, ky:ky + H, :].reshape(N * H, kw).astype(jnp.bfloat16)
        acc = acc + jnp.dot(patch, wb_ref[ky],
                            preferred_element_type=jnp.float32)
    return acc + bias


def gcam_kernel(x_ref, w1_ref, b1_ref, w2_ref, b2_ref, w3_ref, b3_ref,
                alpha_ref, beta_ref, p_ref, pt_ref,
                out_x_ref, out_xc_ref,
                pad_in, pad_mid,
                *, N, H, W, Cin, Cmid, Cout, add_residual):
    Wcin, Wmid, Wcout = W * Cin, W * Cmid, W * Cout
    inv_hw = 1.0 / float(H * W)

    # --- halo-only zeroing: interiors are always fully overwritten ----------
    pad_in[:, 0:1, :] = jnp.zeros((N, 1, Wcin), jnp.float32)
    pad_in[:, H + 1:H + 2, :] = jnp.zeros((N, 1, Wcin), jnp.float32)
    pad_mid[:, 0:1, :] = jnp.zeros((N, 1, Wmid), jnp.float32)
    pad_mid[:, H + 1:H + 2, :] = jnp.zeros((N, 1, Wmid), jnp.float32)

    # --- conv1 + folded bn1 + relu -------------------------------------------
    pad_in[:, 1:H + 1, :] = x_ref[...]
    y1 = jnp.maximum(
        _band_conv(pad_in, w1_ref, b1_ref[...], N, H, Wcin, Wmid), 0.0)
    # TODO(synk): DropPath(0.2) is stochastic depth; identity at inference.

    # --- conv2 + folded bn2 + relu -------------------------------------------
    pad_mid[:, 1:H + 1, :] = y1.reshape(N, H, Wmid)
    y2 = jnp.maximum(
        _band_conv(pad_mid, w2_ref, b2_ref[...], N, H, Wmid, Wmid),
        0.0).reshape(N, H, Wmid)

    # --- GAP -> softmax over the BATCH dim (dim=0) -> tanh ------------------
    g_rows = jnp.sum(y2, axis=1)                                   # (N, W*Cmid)
    g = jnp.dot(g_rows, p_ref[...],
                preferred_element_type=jnp.float32) * inv_hw       # (N, Cmid)
    g = g - jnp.max(g, axis=0, keepdims=True)
    e = jnp.exp(g)
    g_sm = e * pl.reciprocal(jnp.sum(e, axis=0, keepdims=True), approx=True)
    x_c = jnp.tanh(alpha_ref[...] * g_sm + beta_ref[...])          # (N, Cmid)
    out_xc_ref[...] = x_c

    # --- channel gate: x_z = x_c * x ; x = x_z + x ---------------------------
    gate = jnp.dot(x_c, pt_ref[...],
                   preferred_element_type=jnp.float32)             # (N, W*Cmid)
    y2g = y2 * (gate[:, None, :] + 1.0)

    # --- conv3 + folded bn3 + relu (+ residual) ------------------------------
    pad_mid[:, 1:H + 1, :] = y2g                    # halo rows are still zero
    y3 = jnp.maximum(
        _band_conv(pad_mid, w3_ref, b3_ref[...], N, H, Wmid, Wcout), 0.0)
    if add_residual:  # static: in_channels == out_channels
        y3 = y3 + x_ref[...].reshape(N * H, Wcin)
    out_x_ref[...] = y3.reshape(N, H, Wcout)


# ----------------------------------------------------------------------------
# Wrapper (glue: lane-dense repack, banded weights, pallas_call plumbing)
# ----------------------------------------------------------------------------
def _band_weights(w_hwio, W):
    """(3,3,Ci,Co) conv weights -> (3, W*Ci, W*Co) block-banded bf16 matrices.

    band[ky, wi*Ci+ci, wo*Co+co] = w[ky, wi-wo+1, ci, co] if |wi-wo| <= 1 else 0,
    so a single matmul over K = W*Ci applies all 3 kx taps AND the horizontal
    'same' zero padding at once.
    """
    _, _, Ci, Co = w_hwio.shape
    wi = np.arange(W)[:, None]
    wo = np.arange(W)[None, :]
    kx = wi - wo + 1                                               # (W, W)
    valid = jnp.asarray((kx >= 0) & (kx <= 2), jnp.float32)
    kx_c = np.clip(kx, 0, 2)
    band = w_hwio[:, kx_c, :, :] * valid[None, :, :, None, None]   # (3,W,W,Ci,Co)
    band = jnp.transpose(band, (0, 1, 3, 2, 4))                    # (3,W,Ci,W,Co)
    return band.reshape(3, W * Ci, W * Co).astype(jnp.bfloat16)


def gcam_block(x_nchw, w1, b1, w2, b2, w3, b3, alpha, beta):
    """x_nchw: (N, Cin, H, W).  Conv weights are HWIO with BN already folded in."""
    N, Cin, H, W = x_nchw.shape
    Cmid = w1.shape[-1]
    Cout = w3.shape[-1]
    add_residual = (Cin == Cout)

    # lane-dense packing: NCHW -> NHWC -> (N, H, W*C); W*Cmid = 128 here.
    x_packed = jnp.transpose(x_nchw, (0, 2, 3, 1)).astype(jnp.float32)
    x_packed = x_packed.reshape(N, H, W * Cin)

    w1b, w2b, w3b = (_band_weights(w, W) for w in (w1, w2, w3))
    b1p = jnp.tile(b1.astype(jnp.float32), W).reshape(1, W * Cmid)
    b2p = jnp.tile(b2.astype(jnp.float32), W).reshape(1, W * Cmid)
    b3p = jnp.tile(b3.astype(jnp.float32), W).reshape(1, W * Cout)

    # pool / broadcast matrices between the packed (W*Cmid) lane layout and
    # per-channel (Cmid) vectors: pool sums over W, pool.T tiles over W.
    pool = np.zeros((W * Cmid, Cmid), np.float32)
    pool[np.arange(W * Cmid), np.arange(W * Cmid) % Cmid] = 1.0
    p = jnp.asarray(pool)
    pt = jnp.asarray(np.ascontiguousarray(pool.T))

    kern = functools.partial(gcam_kernel, N=N, H=H, W=W, Cin=Cin, Cmid=Cmid,
                             Cout=Cout, add_residual=add_residual)
    vmem = lambda: pl.BlockSpec(memory_space=pltpu.MemorySpace.VMEM)

    # TODO(synk): for large H/W/C, tile over H with a grid (two-phase GAP
    # reduction + dimension_semantics=("parallel", ...)) so input DMA is
    # pipelined and the working set fits v7x's 64 MiB VMEM; at these shapes
    # everything fits comfortably, so one fused invocation is fastest.
    out_x, out_xc = pl.pallas_call(
        kern,
        out_shape=(jax.ShapeDtypeStruct((N, H, W * Cout), jnp.float32),
                   jax.ShapeDtypeStruct((N, Cmid), jnp.float32)),
        in_specs=[vmem() for _ in range(11)],
        out_specs=(vmem(), vmem()),
        scratch_shapes=[pltpu.VMEM((N, H + 2, W * Cin), jnp.float32),
                        pltpu.VMEM((N, H + 2, W * Cmid), jnp.float32)],
        compiler_params=pltpu.CompilerParams(
            vmem_limit_bytes=32 * 1024 * 1024),
    )(x_packed, w1b, b1p, w2b, b2p, w3b, b3p,
      alpha.reshape(1, -1).astype(jnp.float32),
      beta.reshape(1, -1).astype(jnp.float32),
      p, pt)

    out_nchw = jnp.transpose(out_x.reshape(N, H, W, Cout), (0, 3, 1, 2))
    return out_nchw, out_xc.reshape(N, Cmid, 1, 1)


# ----------------------------------------------------------------------------
# Pure-JAX reference (for correctness check) — NHWC, same folded params.
# Conv operands are cast to bf16 (f32 accumulation) to match the kernel.
# ----------------------------------------------------------------------------
def _ref_forward(x_nhwc, w1, b1, w2, b2, w3, b3, alpha, beta, add_residual):
    def conv(x, w, b):
        y = jax.lax.conv_general_dilated(
            x.astype(jnp.bfloat16), w.astype(jnp.bfloat16),
            window_strides=(1, 1), padding="SAME",
            dimension_numbers=("NHWC", "HWIO", "NHWC"),
            preferred_element_type=jnp.float32)
        return jnp.maximum(y + b, 0.0)

    y1 = conv(x_nhwc, w1, b1)
    y2 = conv(y1, w2, b2)
    g = jnp.mean(y2, axis=(1, 2))
    g = jax.nn.softmax(g, axis=0)          # softmax over batch dim
    xc = jnp.tanh(alpha * g + beta)
    y2g = xc[:, None, None, :] * y2 + y2
    y3 = conv(y2g, w3, b3)
    if add_residual:
        y3 = y3 + x_nhwc
    return y3, xc


def _fold_bn(w, b, gamma, bn_beta, mean, var, eps=1e-5):
    scale = gamma / jnp.sqrt(var + eps)          # (Cout,)
    return w * scale, (b - mean) * scale + bn_beta


# ----------------------------------------------------------------------------
if __name__ == "__main__":
    N, Cin, Cmid, Cout, H, W = 2, 4, 8, 4, 16, 16

    key = jax.random.PRNGKey(0)
    ks = jax.random.split(key, 32)
    u = lambda k, shape, lo, hi: jax.random.uniform(k, shape, jnp.float32, lo, hi)

    # raw conv params (HWIO) + BN params, initialized deterministically
    def make_layer(k0, k1, k2, k3, k4, k5, ci, co):
        w = u(k0, (3, 3, ci, co), -0.3, 0.3)
        b = u(k1, (co,), -0.1, 0.1)
        gamma = u(k2, (co,), 0.5, 1.5)
        bn_beta = u(k3, (co,), -0.2, 0.2)
        mean = u(k4, (co,), -0.2, 0.2)
        var = u(k5, (co,), 0.5, 1.5)
        return _fold_bn(w, b, gamma, bn_beta, mean, var)

    w1, b1 = make_layer(*ks[0:6], Cin, Cmid)
    w2, b2 = make_layer(*ks[6:12], Cmid, Cmid)
    w3, b3 = make_layer(*ks[12:18], Cmid, Cout)
    alpha = u(ks[18], (Cmid,), 0.0, 1.0)   # torch.rand(mid, 1, 1)
    beta = u(ks[19], (Cmid,), 0.0, 1.0)

    x = u(ks[20], (N, Cin, H, W), -1.0, 1.0)   # NCHW input, like PyTorch

    out_x, out_xc = jax.jit(gcam_block)(x, w1, b1, w2, b2, w3, b3, alpha, beta)
    jax.block_until_ready((out_x, out_xc))

    # reference check (tolerance loosened for bf16 matmul operands + approx
    # reciprocal in the softmax denominator)
    x_nhwc = jnp.transpose(x, (0, 2, 3, 1))
    ref_x, ref_xc = _ref_forward(x_nhwc, w1, b1, w2, b2, w3, b3, alpha, beta,
                                 add_residual=(Cin == Cout))
    ref_x = jnp.transpose(ref_x, (0, 3, 1, 2))
    np.testing.assert_allclose(np.asarray(out_x), np.asarray(ref_x),
                               rtol=5e-2, atol=5e-2)
    np.testing.assert_allclose(np.asarray(out_xc).reshape(N, Cmid),
                               np.asarray(ref_xc), rtol=5e-2, atol=5e-2)

    print("KERNEL_OK")
</pallas_src>

<mosaic_0001>
module attributes {stable_mosaic.version = 11 : i64} {
  func.func @gcam_kernel(%arg0: memref<2x16x64xf32, #tpu.memory_space<vmem>>, %arg1: memref<3x64x128xbf16, #tpu.memory_space<vmem>>, %arg2: memref<1x128xf32, #tpu.memory_space<vmem>>, %arg3: memref<3x128x128xbf16, #tpu.memory_space<vmem>>, %arg4: memref<1x128xf32, #tpu.memory_space<vmem>>, %arg5: memref<3x128x64xbf16, #tpu.memory_space<vmem>>, %arg6: memref<1x64xf32, #tpu.memory_space<vmem>>, %arg7: memref<1x8xf32, #tpu.memory_space<vmem>>, %arg8: memref<1x8xf32, #tpu.memory_space<vmem>>, %arg9: memref<128x8xf32, #tpu.memory_space<vmem>>, %arg10: memref<8x128xf32, #tpu.memory_space<vmem>>, %arg11: memref<2x16x64xf32, #tpu.memory_space<vmem>>, %arg12: memref<2x8xf32, #tpu.memory_space<vmem>>, %arg13: memref<2x18x64xf32, #tpu.memory_space<vmem>>, %arg14: memref<2x18x128xf32, #tpu.memory_space<vmem>>) attributes {dimension_semantics = [], scalar_prefetch = 0 : i64, scratch_operands = 2 : i64, tpu.core_type = #tpu.core_type<tc>} {
    %cst = arith.constant 0.000000e+00 : f32
    %0 = vector.broadcast %cst : f32 to vector<2x1x64xf32>
    %c0 = arith.constant 0 : index
    %c0_0 = arith.constant 0 : index
    %c0_1 = arith.constant 0 : index
    %1 = vector.load %arg13[%c0, %c0_0, %c0_1] : memref<2x18x64xf32, #tpu.memory_space<vmem>>, vector<2x1x64xf32>
    tpu.vector_store %arg13[%c0, %c0_0, %c0_1], %0 {strides = array<i32>} : memref<2x18x64xf32, #tpu.memory_space<vmem>>, vector<2x1x64xf32>,
    %cst_2 = arith.constant 0.000000e+00 : f32
    %2 = vector.broadcast %cst_2 : f32 to vector<2x1x64xf32>
    %c0_3 = arith.constant 0 : index
    %c17 = arith.constant 17 : index
    %c0_4 = arith.constant 0 : index
    %3 = vector.load %arg13[%c0_3, %c17, %c0_4] : memref<2x18x64xf32, #tpu.memory_space<vmem>>, vector<2x1x64xf32>
    tpu.vector_store %arg13[%c0_3, %c17, %c0_4], %2 {strides = array<i32>} : memref<2x18x64xf32, #tpu.memory_space<vmem>>, vector<2x1x64xf32>,
    %cst_5 = arith.constant 0.000000e+00 : f32
    %4 = vector.broadcast %cst_5 : f32 to vector<2x1x128xf32>
    %c0_6 = arith.constant 0 : index
    %c0_7 = arith.constant 0 : index
    %c0_8 = arith.constant 0 : index
    %5 = vector.load %arg14[%c0_6, %c0_7, %c0_8] : memref<2x18x128xf32, #tpu.memory_space<vmem>>, vector<2x1x128xf32>
    tpu.vector_store %arg14[%c0_6, %c0_7, %c0_8], %4 {strides = array<i32>} : memref<2x18x128xf32, #tpu.memory_space<vmem>>, vector<2x1x128xf32>,
    %cst_9 = arith.constant 0.000000e+00 : f32
    %6 = vector.broadcast %cst_9 : f32 to vector<2x1x128xf32>
    %c0_10 = arith.constant 0 : index
    %c17_11 = arith.constant 17 : index
    %c0_12 = arith.constant 0 : index
    %7 = vector.load %arg14[%c0_10, %c17_11, %c0_12] : memref<2x18x128xf32, #tpu.memory_space<vmem>>, vector<2x1x128xf32>
    tpu.vector_store %arg14[%c0_10, %c17_11, %c0_12], %6 {strides = array<i32>} : memref<2x18x128xf32, #tpu.memory_space<vmem>>, vector<2x1x128xf32>,
    %c0_13 = arith.constant 0 : index
    %c0_14 = arith.constant 0 : index
    %c0_15 = arith.constant 0 : index
    %8 = vector.load %arg0[%c0_13, %c0_14, %c0_15] : memref<2x16x64xf32, #tpu.memory_space<vmem>>, vector<2x16x64xf32>
    %c0_16 = arith.constant 0 : index
    %c1 = arith.constant 1 : index
    %c0_17 = arith.constant 0 : index
    %9 = vector.load %arg13[%c0_16, %c1, %c0_17] : memref<2x18x64xf32, #tpu.memory_space<vmem>>, vector<2x16x64xf32>
    tpu.vector_store %arg13[%c0_16, %c1, %c0_17], %8 {strides = array<i32>} : memref<2x18x64xf32, #tpu.memory_space<vmem>>, vector<2x16x64xf32>,
    %c0_18 = arith.constant 0 : index
    %c0_19 = arith.constant 0 : index
    %10 = vector.load %arg2[%c0_18, %c0_19] : memref<1x128xf32, #tpu.memory_space<vmem>>, vector<1x128xf32>
    %cst_20 = arith.constant 0.000000e+00 : f32
    %11 = vector.broadcast %cst_20 : f32 to vector<32x128xf32>
    %c0_21 = arith.constant 0 : index
    %c0_22 = arith.constant 0 : index
    %c0_23 = arith.constant 0 : index
    %12 = vector.load %arg13[%c0_21, %c0_22, %c0_23] : memref<2x18x64xf32, #tpu.memory_space<vmem>>, vector<2x16x64xf32>
    %13 = vector.shape_cast %12 : vector<2x16x64xf32> to vector<32x64xf32>
    %14 = arith.truncf %13 : vector<32x64xf32> to vector<32x64xbf16>
    %c0_24 = arith.constant 0 : index
    %c0_25 = arith.constant 0 : index
    %c0_26 = arith.constant 0 : index
    %15 = vector.load %arg1[%c0_24, %c0_25, %c0_26] : memref<3x64x128xbf16, #tpu.memory_space<vmem>>, vector<1x64x128xbf16>
    %16 = vector.shape_cast %15 : vector<1x64x128xbf16> to vector<64x128xbf16>
    %cst_27 = arith.constant dense<0.000000e+00> : vector<32x128xf32>
    %17 = tpu.matmul %14, %16, %cst_27 {dimension_numbers = #tpu.dot_dimension_numbers<[1], [0], [0], [1], [0, 0, 1, 1], [], []>} : vector<32x64xbf16>, vector<64x128xbf16>, vector<32x128xf32> -> vector<32x128xf32>
    %18 = arith.addf %11, %17 : vector<32x128xf32>
    %c0_28 = arith.constant 0 : index
    %c1_29 = arith.constant 1 : index
    %c0_30 = arith.constant 0 : index
    %19 = vector.load %arg13[%c0_28, %c1_29, %c0_30] : memref<2x18x64xf32, #tpu.memory_space<vmem>>, vector<2x16x64xf32>
    %20 = vector.shape_cast %19 : vector<2x16x64xf32> to vector<32x64xf32>
    %21 = arith.truncf %20 : vector<32x64xf32> to vector<32x64xbf16>
    %c1_31 = arith.constant 1 : index
    %c0_32 = arith.constant 0 : index
    %c0_33 = arith.constant 0 : index
    %22 = vector.load %arg1[%c1_31, %c0_32, %c0_33] : memref<3x64x128xbf16, #tpu.memory_space<vmem>>, vector<1x64x128xbf16>
    %23 = vector.shape_cast %22 : vector<1x64x128xbf16> to vector<64x128xbf16>
    %cst_34 = arith.constant dense<0.000000e+00> : vector<32x128xf32>
    %24 = tpu.matmul %21, %23, %cst_34 {dimension_numbers = #tpu.dot_dimension_numbers<[1], [0], [0], [1], [0, 0, 1, 1], [], []>} : vector<32x64xbf16>, vector<64x128xbf16>, vector<32x128xf32> -> vector<32x128xf32>
    %25 = arith.addf %18, %24 : vector<32x128xf32>
    %c0_35 = arith.constant 0 : index
    %c2 = arith.constant 2 : index
    %c0_36 = arith.constant 0 : index
    %26 = vector.load %arg13[%c0_35, %c2, %c0_36] : memref<2x18x64xf32, #tpu.memory_space<vmem>>, vector<2x16x64xf32>
    %27 = vector.shape_cast %26 : vector<2x16x64xf32> to vector<32x64xf32>
    %28 = arith.truncf %27 : vector<32x64xf32> to vector<32x64xbf16>
    %c2_37 = arith.constant 2 : index
    %c0_38 = arith.constant 0 : index
    %c0_39 = arith.constant 0 : index
    %29 = vector.load %arg1[%c2_37, %c0_38, %c0_39] : memref<3x64x128xbf16, #tpu.memory_space<vmem>>, vector<1x64x128xbf16>
    %30 = vector.shape_cast %29 : vector<1x64x128xbf16> to vector<64x128xbf16>
    %cst_40 = arith.constant dense<0.000000e+00> : vector<32x128xf32>
    %31 = tpu.matmul %28, %30, %cst_40 {dimension_numbers = #tpu.dot_dimension_numbers<[1], [0], [0], [1], [0, 0, 1, 1], [], []>} : vector<32x64xbf16>, vector<64x128xbf16>, vector<32x128xf32> -> vector<32x128xf32>
    %32 = arith.addf %25, %31 : vector<32x128xf32>
    %33 = vector.broadcast %10 : vector<1x128xf32> to vector<32x128xf32>
    %34 = arith.addf %32, %33 : vector<32x128xf32>
    %cst_41 = arith.constant 0.000000e+00 : f32
    %35 = vector.broadcast %cst_41 : f32 to vector<32x128xf32>
    %36 = arith.maximumf %34, %35 : vector<32x128xf32>
    %37 = vector.shape_cast %36 : vector<32x128xf32> to vector<2x16x128xf32>
    %c0_42 = arith.constant 0 : index
    %c1_43 = arith.constant 1 : index
    %c0_44 = arith.constant 0 : index
    %38 = vector.load %arg14[%c0_42, %c1_43, %c0_44] : memref<2x18x128xf32, #tpu.memory_space<vmem>>, vector<2x16x128xf32>
    tpu.vector_store %arg14[%c0_42, %c1_43, %c0_44], %37 {strides = array<i32>} : memref<2x18x128xf32, #tpu.memory_space<vmem>>, vector<2x16x128xf32>,
    %c0_45 = arith.constant 0 : index
    %c0_46 = arith.constant 0 : index
    %39 = vector.load %arg4[%c0_45, %c0_46] : memref<1x128xf32, #tpu.memory_space<vmem>>, vector<1x128xf32>
    %cst_47 = arith.constant 0.000000e+00 : f32
    %40 = vector.broadcast %cst_47 : f32 to vector<32x128xf32>
    %c0_48 = arith.constant 0 : index
    %c0_49 = arith.constant 0 : index
    %c0_50 = arith.constant 0 : index
    %41 = vector.load %arg14[%c0_48, %c0_49, %c0_50] : memref<2x18x128xf32, #tpu.memory_space<vmem>>, vector<2x16x128xf32>
    %42 = vector.shape_cast %41 : vector<2x16x128xf32> to vector<32x128xf32>
    %43 = arith.truncf %42 : vector<32x128xf32> to vector<32x128xbf16>
    %c0_51 = arith.constant 0 : index
    %c0_52 = arith.constant 0 : index
    %c0_53 = arith.constant 0 : index
    %44 = vector.load %arg3[%c0_51, %c0_52, %c0_53] : memref<3x128x128xbf16, #tpu.memory_space<vmem>>, vector<1x128x128xbf16>
    %45 = vector.shape_cast %44 : vector<1x128x128xbf16> to vector<128x128xbf16>
    %cst_54 = arith.constant dense<0.000000e+00> : vector<32x128xf32>
    %46 = tpu.matmul %43, %45, %cst_54 {dimension_numbers = #tpu.dot_dimension_numbers<[1], [0], [0], [1], [0, 0, 1, 1], [], []>} : vector<32x128xbf16>, vector<128x128xbf16>, vector<32x128xf32> -> vector<32x128xf32>
    %47 = arith.addf %40, %46 : vector<32x128xf32>
    %c0_55 = arith.constant 0 : index
    %c1_56 = arith.constant 1 : index
    %c0_57 = arith.constant 0 : index
    %48 = vector.load %arg14[%c0_55, %c1_56, %c0_57] : memref<2x18x128xf32, #tpu.memory_space<vmem>>, vector<2x16x128xf32>
    %49 = vector.shape_cast %48 : vector<2x16x128xf32> to vector<32x128xf32>
    %50 = arith.truncf %49 : vector<32x128xf32> to vector<32x128xbf16>
    %c1_58 = arith.constant 1 : index
    %c0_59 = arith.constant 0 : index
    %c0_60 = arith.constant 0 : index
    %51 = vector.load %arg3[%c1_58, %c0_59, %c0_60] : memref<3x128x128xbf16, #tpu.memory_space<vmem>>, vector<1x128x128xbf16>
    %52 = vector.shape_cast %51 : vector<1x128x128xbf16> to vector<128x128xbf16>
    %cst_61 = arith.constant dense<0.000000e+00> : vector<32x128xf32>
    %53 = tpu.matmul %50, %52, %cst_61 {dimension_numbers = #tpu.dot_dimension_numbers<[1], [0], [0], [1], [0, 0, 1, 1], [], []>} : vector<32x128xbf16>, vector<128x128xbf16>, vector<32x128xf32> -> vector<32x128xf32>
    %54 = arith.addf %47, %53 : vector<32x128xf32>
    %c0_62 = arith.constant 0 : index
    %c2_63 = arith.constant 2 : index
    %c0_64 = arith.constant 0 : index
    %55 = vector.load %arg14[%c0_62, %c2_63, %c0_64] : memref<2x18x128xf32, #tpu.memory_space<vmem>>, vector<2x16x128xf32>
    %56 = vector.shape_cast %55 : vector<2x16x128xf32> to vector<32x128xf32>
    %57 = arith.truncf %56 : vector<32x128xf32> to vector<32x128xbf16>
    %c2_65 = arith.constant 2 : index
    %c0_66 = arith.constant 0 : index
    %c0_67 = arith.constant 0 : index
    %58 = vector.load %arg3[%c2_65, %c0_66, %c0_67] : memref<3x128x128xbf16, #tpu.memory_space<vmem>>, vector<1x128x128xbf16>
    %59 = vector.shape_cast %58 : vector<1x128x128xbf16> to vector<128x128xbf16>
    %cst_68 = arith.constant dense<0.000000e+00> : vector<32x128xf32>
    %60 = tpu.matmul %57, %59, %cst_68 {dimension_numbers = #tpu.dot_dimension_numbers<[1], [0], [0], [1], [0, 0, 1, 1], [], []>} : vector<32x128xbf16>, vector<128x128xbf16>, vector<32x128xf32> -> vector<32x128xf32>
    %61 = arith.addf %54, %60 : vector<32x128xf32>
    %62 = vector.broadcast %39 : vector<1x128xf32> to vector<32x128xf32>
    %63 = arith.addf %61, %62 : vector<32x128xf32>
    %cst_69 = arith.constant 0.000000e+00 : f32
    %64 = vector.broadcast %cst_69 : f32 to vector<32x128xf32>
    %65 = arith.maximumf %63, %64 : vector<32x128xf32>
    %66 = vector.shape_cast %65 : vector<32x128xf32> to vector<2x16x128xf32>
    %cst_70 = arith.constant dense<0.000000e+00> : vector<2x128xf32>
    %67 = vector.multi_reduction <add>, %66, %cst_70 [1] : vector<2x16x128xf32> to vector<2x128xf32>
    %c0_71 = arith.constant 0 : index
    %c0_72 = arith.constant 0 : index
    %68 = vector.load %arg9[%c0_71, %c0_72] : memref<128x8xf32, #tpu.memory_space<vmem>>, vector<128x8xf32>
    %cst_73 = arith.constant dense<0.000000e+00> : vector<2x8xf32>
    %69 = tpu.matmul %67, %68, %cst_73 {dimension_numbers = #tpu.dot_dimension_numbers<[1], [0], [0], [1], [0, 0, 1, 1], [], []>} : vector<2x128xf32>, vector<128x8xf32>, vector<2x8xf32> -> vector<2x8xf32>
    %cst_74 = arith.constant 3.906250e-03 : f32
    %70 = vector.broadcast %cst_74 : f32 to vector<2x8xf32>
    %71 = arith.mulf %69, %70 : vector<2x8xf32>
    %cst_75 = arith.constant dense<0xFF800000> : vector<8xf32>
    %72 = vector.multi_reduction <maximumf>, %71, %cst_75 [0] : vector<2x8xf32> to vector<8xf32>
    %73 = vector.shape_cast %72 : vector<8xf32> to vector<1x8xf32>
    %74 = vector.broadcast %73 : vector<1x8xf32> to vector<2x8xf32>
    %75 = arith.subf %71, %74 : vector<2x8xf32>
    %76 = math.exp %75 : vector<2x8xf32>
    %cst_76 = arith.constant dense<0.000000e+00> : vector<8xf32>
    %77 = vector.multi_reduction <add>, %76, %cst_76 [0] : vector<2x8xf32> to vector<8xf32>
    %78 = vector.shape_cast %77 : vector<8xf32> to vector<1x8xf32>
    %79 = tpu.reciprocal %78 {approx = true} : vector<1x8xf32> -> vector<1x8xf32>
    %80 = vector.broadcast %79 : vector<1x8xf32> to vector<2x8xf32>
    %81 = arith.mulf %76, %80 : vector<2x8xf32>
    %c0_77 = arith.constant 0 : index
    %c0_78 = arith.constant 0 : index
    %82 = vector.load %arg7[%c0_77, %c0_78] : memref<1x8xf32, #tpu.memory_space<vmem>>, vector<1x8xf32>
    %83 = vector.broadcast %82 : vector<1x8xf32> to vector<2x8xf32>
    %84 = arith.mulf %83, %81 : vector<2x8xf32>
    %c0_79 = arith.constant 0 : index
    %c0_80 = arith.constant 0 : index
    %85 = vector.load %arg8[%c0_79, %c0_80] : memref<1x8xf32, #tpu.memory_space<vmem>>, vector<1x8xf32>
    %86 = vector.broadcast %85 : vector<1x8xf32> to vector<2x8xf32>
    %87 = arith.addf %84, %86 : vector<2x8xf32>
    %88 = math.tanh %87 : vector<2x8xf32>
    %c0_81 = arith.constant 0 : index
    %c0_82 = arith.constant 0 : index
    %89 = vector.load %arg12[%c0_81, %c0_82] : memref<2x8xf32, #tpu.memory_space<vmem>>, vector<2x8xf32>
    tpu.vector_store %arg12[%c0_81, %c0_82], %88 {strides = array<i32>} : memref<2x8xf32, #tpu.memory_space<vmem>>, vector<2x8xf32>,
    %c0_83 = arith.constant 0 : index
    %c0_84 = arith.constant 0 : index
    %90 = vector.load %arg10[%c0_83, %c0_84] : memref<8x128xf32, #tpu.memory_space<vmem>>, vector<8x128xf32>
    %cst_85 = arith.constant dense<0.000000e+00> : vector<2x128xf32>
    %91 = tpu.matmul %88, %90, %cst_85 {dimension_numbers = #tpu.dot_dimension_numbers<[1], [0], [0], [1], [0, 0, 1, 1], [], []>} : vector<2x8xf32>, vector<8x128xf32>, vector<2x128xf32> -> vector<2x128xf32>
    %92 = vector.shape_cast %91 : vector<2x128xf32> to vector<2x1x128xf32>
    %cst_86 = arith.constant 1.000000e+00 : f32
    %93 = vector.broadcast %cst_86 : f32 to vector<2x1x128xf32>
    %94 = arith.addf %92, %93 : vector<2x1x128xf32>
    %95 = vector.broadcast %94 : vector<2x1x128xf32> to vector<2x16x128xf32>
    %96 = arith.mulf %66, %95 : vector<2x16x128xf32>
    %c0_87 = arith.constant 0 : index
    %c1_88 = arith.constant 1 : index
    %c0_89 = arith.constant 0 : index
    %97 = vector.load %arg14[%c0_87, %c1_88, %c0_89] : memref<2x18x128xf32, #tpu.memory_space<vmem>>, vector<2x16x128xf32>
    tpu.vector_store %arg14[%c0_87, %c1_88, %c0_89], %96 {strides = array<i32>} : memref<2x18x128xf32, #tpu.memory_space<vmem>>, vector<2x16x128xf32>,
    %c0_90 = arith.constant 0 : index
    %c0_91 = arith.constant 0 : index
    %98 = vector.load %arg6[%c0_90, %c0_91] : memref<1x64xf32, #tpu.memory_space<vmem>>, vector<1x64xf32>
    %cst_92 = arith.constant 0.000000e+00 : f32
    %99 = vector.broadcast %cst_92 : f32 to vector<32x64xf32>
    %c0_93 = arith.constant 0 : index
    %c0_94 = arith.constant 0 : index
    %c0_95 = arith.constant 0 : index
    %100 = vector.load %arg14[%c0_93, %c0_94, %c0_95] : memref<2x18x128xf32, #tpu.memory_space<vmem>>, vector<2x16x128xf32>
    %101 = vector.shape_cast %100 : vector<2x16x128xf32> to vector<32x128xf32>
    %102 = arith.truncf %101 : vector<32x128xf32> to vector<32x128xbf16>
    %c0_96 = arith.constant 0 : index
    %c0_97 = arith.constant 0 : index
    %c0_98 = arith.constant 0 : index
    %103 = vector.load %arg5[%c0_96, %c0_97, %c0_98] : memref<3x128x64xbf16, #tpu.memory_space<vmem>>, vector<1x128x64xbf16>
    %104 = vector.shape_cast %103 : vector<1x128x64xbf16> to vector<128x64xbf16>
    %cst_99 = arith.constant dense<0.000000e+00> : vector<32x64xf32>
    %105 = tpu.matmul %102, %104, %cst_99 {dimension_numbers = #tpu.dot_dimension_numbers<[1], [0], [0], [1], [0, 0, 1, 1], [], []>} : vector<32x128xbf16>, vector<128x64xbf16>, vector<32x64xf32> -> vector<32x64xf32>
    %106 = arith.addf %99, %105 : vector<32x64xf32>
    %c0_100 = arith.constant 0 : index
    %c1_101 = arith.constant 1 : index
    %c0_102 = arith.constant 0 : index
    %107 = vector.load %arg14[%c0_100, %c1_101, %c0_102] : memref<2x18x128xf32, #tpu.memory_space<vmem>>, vector<2x16x128xf32>
    %108 = vector.shape_cast %107 : vector<2x16x128xf32> to vector<32x128xf32>
    %109 = arith.truncf %108 : vector<32x128xf32> to vector<32x128xbf16>
    %c1_103 = arith.constant 1 : index
    %c0_104 = arith.constant 0 : index
    %c0_105 = arith.constant 0 : index
    %110 = vector.load %arg5[%c1_103, %c0_104, %c0_105] : memref<3x128x64xbf16, #tpu.memory_space<vmem>>, vector<1x128x64xbf16>
    %111 = vector.shape_cast %110 : vector<1x128x64xbf16> to vector<128x64xbf16>
    %cst_106 = arith.constant dense<0.000000e+00> : vector<32x64xf32>
    %112 = tpu.matmul %109, %111, %cst_106 {dimension_numbers = #tpu.dot_dimension_numbers<[1], [0], [0], [1], [0, 0, 1, 1], [], []>} : vector<32x128xbf16>, vector<128x64xbf16>, vector<32x64xf32> -> vector<32x64xf32>
    %113 = arith.addf %106, %112 : vector<32x64xf32>
    %c0_107 = arith.constant 0 : index
    %c2_108 = arith.constant 2 : index
    %c0_109 = arith.constant 0 : index
    %114 = vector.load %arg14[%c0_107, %c2_108, %c0_109] : memref<2x18x128xf32, #tpu.memory_space<vmem>>, vector<2x16x128xf32>
    %115 = vector.shape_cast %114 : vector<2x16x128xf32> to vector<32x128xf32>
    %116 = arith.truncf %115 : vector<32x128xf32> to vector<32x128xbf16>
    %c2_110 = arith.constant 2 : index
    %c0_111 = arith.constant 0 : index
    %c0_112 = arith.constant 0 : index
    %117 = vector.load %arg5[%c2_110, %c0_111, %c0_112] : memref<3x128x64xbf16, #tpu.memory_space<vmem>>, vector<1x128x64xbf16>
    %118 = vector.shape_cast %117 : vector<1x128x64xbf16> to vector<128x64xbf16>
    %cst_113 = arith.constant dense<0.000000e+00> : vector<32x64xf32>
    %119 = tpu.matmul %116, %118, %cst_113 {dimension_numbers = #tpu.dot_dimension_numbers<[1], [0], [0], [1], [0, 0, 1, 1], [], []>} : vector<32x128xbf16>, vector<128x64xbf16>, vector<32x64xf32> -> vector<32x64xf32>
    %120 = arith.addf %113, %119 : vector<32x64xf32>
    %121 = vector.broadcast %98 : vector<1x64xf32> to vector<32x64xf32>
    %122 = arith.addf %120, %121 : vector<32x64xf32>
    %cst_114 = arith.constant 0.000000e+00 : f32
    %123 = vector.broadcast %cst_114 : f32 to vector<32x64xf32>
    %124 = arith.maximumf %122, %123 : vector<32x64xf32>
    %c0_115 = arith.constant 0 : index
    %c0_116 = arith.constant 0 : index
    %c0_117 = arith.constant 0 : index
    %125 = vector.load %arg0[%c0_115, %c0_116, %c0_117] : memref<2x16x64xf32, #tpu.memory_space<vmem>>, vector<2x16x64xf32>
    %126 = vector.shape_cast %125 : vector<2x16x64xf32> to vector<32x64xf32>
    %127 = arith.addf %124, %126 : vector<32x64xf32>
    %128 = vector.shape_cast %127 : vector<32x64xf32> to vector<2x16x64xf32>
    %c0_118 = arith.constant 0 : index
    %c0_119 = arith.constant 0 : index
    %c0_120 = arith.constant 0 : index
    %129 = vector.load %arg11[%c0_118, %c0_119, %c0_120] : memref<2x16x64xf32, #tpu.memory_space<vmem>>, vector<2x16x64xf32>
    tpu.vector_store %arg11[%c0_118, %c0_119, %c0_120], %128 {strides = array<i32>} : memref<2x16x64xf32, #tpu.memory_space<vmem>>, vector<2x16x64xf32>,
    return
  }
}

</mosaic_0001>

<llo_original>
// kernel: tile.18
$region0: #{tile.18}
  #allocation0 [shape = 's32[1]{0}', space=sflag, size = 0x4, scoped, tag = 'scoped memory for tile.18']
  %s0 = inlined_call_operand.vmem [shape: f32[8], index: 0, kind: input, shape index: {}]
  %s1 = inlined_call_operand.vmem [shape: f32[16,8], index: 1, kind: output, shape index: {}]
  // Predicated region
  $region2: #{tile.18} parent=0 // pred_check
    _
  $region3: #{tile.18} parent=0 // pred_check_branch
    %3 = sbr.rel (0) target = $region5
  $region4: #{tile.18} parent=0 // pred_region
    _
  $region5: #{tile.18} parent=0 // pred_fallthru
    _
  %v4 = vld [vmem:[%s0] ss:$0 sm:$0xff]
  %5 = vst [vmem:[%s1] sm:$0xff] %v4
  %s6 = scalar_lea.vmem %s1, 8
  %7 = vst [vmem:[%s6] sm:$0xff] %v4

// kernel: tile.19
$region0: #{tile.19}
  %s0 = inlined_call_operand.vmem [shape: f32[16,8], index: 0, kind: input, shape index: {}]
  %s1 = inlined_call_operand.vmem [shape: f32[1,128], index: 1, kind: output, shape index: {}]
  $region1: #{tile.19} parent=0
    #allocation0 [shape = 'u8[4096]{0}', space=vmem, size = 0x1000, scoped, tag = 'scoped mem for output reshape']
    %v2 = vld [vmem:[%s0] sm:$0x1]
    %vm3 = vcmask 64512
    %4 = vst.msk [vmem:[#allocation0] sm:$0x1] %vm3, %v2
    %s5 = scalar_lea.vmem %s0, 15
    %v6 = vld [vmem:[%s5] sm:$0x1]
    %7 = vrot.lane.b32.xlu0 %v6, 120
    %v8 = vpop.permute.xlu0 %7
    %vm9 = vcmask 1048512
    %10 = vst.msk [vmem:[#allocation0] sm:$0x1] %vm9, %v8
    %s11 = scalar_lea.vmem %s0, 14
    %v12 = vld [vmem:[%s11] sm:$0x1]
    %13 = vrot.lane.b32.xlu0 %v12, 112
    %v14 = vpop.permute.xlu0 %13
    %vm15 = vcmask 982912
    %16 = vst.msk [vmem:[#allocation0] sm:$0x1] %vm15, %v14
    %s17 = scalar_lea.vmem %s0, 13
    %v18 = vld [vmem:[%s17] sm:$0x1]
    %19 = vrot.lane.b32.xlu0 %v18, 104
    %v20 = vpop.permute.xlu0 %19
    %vm21 = vcmask 917312
    %22 = vst.msk [vmem:[#allocation0] sm:$0x1] %vm21, %v20
    %s23 = scalar_lea.vmem %s0, 12
    %v24 = vld [vmem:[%s23] sm:$0x1]
    %25 = vrot.lane.b32.xlu0 %v24, 96
    %v26 = vpop.permute.xlu0 %25
    %vm27 = vcmask 851712
    %28 = vst.msk [vmem:[#allocation0] sm:$0x1] %vm27, %v26
    %s29 = scalar_lea.vmem %s0, 11
    %v30 = vld [vmem:[%s29] sm:$0x1]
    %31 = vrot.lane.b32.xlu0 %v30, 88
    %v32 = vpop.permute.xlu0 %31
    %vm33 = vcmask 786112
    %34 = vst.msk [vmem:[#allocation0] sm:$0x1] %vm33, %v32
    %s35 = scalar_lea.vmem %s0, 10
    %v36 = vld [vmem:[%s35] sm:$0x1]
    %37 = vrot.lane.b32.xlu0 %v36, 80
    %v38 = vpop.permute.xlu0 %37
    %vm39 = vcmask 720512
    %40 = vst.msk [vmem:[#allocation0] sm:$0x1] %vm39, %v38
    %s41 = scalar_lea.vmem %s0, 9
    %v42 = vld [vmem:[%s41] sm:$0x1]
    %43 = vrot.lane.b32.xlu0 %v42, 72
    %v44 = vpop.permute.xlu0 %43
    %vm45 = vcmask 654912
    %46 = vst.msk [vmem:[#allocation0] sm:$0x1] %vm45, %v44
    %s47 = scalar_lea.vmem %s0, 8
    %v48 = vld [vmem:[%s47] sm:$0x1]
    %49 = vrot.lane.b32.xlu0 %v48, 64
    %v50 = vpop.permute.xlu0 %49
    %vm51 = vcmask 589312
    %52 = vst.msk [vmem:[#allocation0] sm:$0x1] %vm51, %v50
    %s53 = scalar_lea.vmem %s0, 7
    %v54 = vld [vmem:[%s53] sm:$0x1]
    %55 = vrot.lane.b32.xlu0 %v54, 56
    %v56 = vpop.permute.xlu0 %55
    %vm57 = vcmask 523712
    %58 = vst.msk [vmem:[#allocation0] sm:$0x1] %vm57, %v56
    %s59 = scalar_lea.vmem %s0, 6
    %v60 = vld [vmem:[%s59] sm:$0x1]
    %61 = vrot.lane.b32.xlu0 %v60, 48
    %v62 = vpop.permute.xlu0 %61
    %vm63 = vcmask 458112
    %64 = vst.msk [vmem:[#allocation0] sm:$0x1] %vm63, %v62
    %s65 = scalar_lea.vmem %s0, 5
    %v66 = vld [vmem:[%s65] sm:$0x1]
    %67 = vrot.lane.b32.xlu0 %v66, 40
    %v68 = vpop.permute.xlu0 %67
    %vm69 = vcmask 392512
    %70 = vst.msk [vmem:[#allocation0] sm:$0x1] %vm69, %v68
    %s71 = scalar_lea.vmem %s0, 4
    %v72 = vld [vmem:[%s71] sm:$0x1]
    %73 = vrot.lane.b32.xlu0 %v72, 32
    %v74 = vpop.permute.xlu0 %73
    %vm75 = vcmask 326912
    %76 = vst.msk [vmem:[#allocation0] sm:$0x1] %vm75, %v74
    %s77 = scalar_lea.vmem %s0, 3
    %v78 = vld [vmem:[%s77] sm:$0x1]
    %79 = vrot.lane.b32.xlu0 %v78, 24
    %v80 = vpop.permute.xlu0 %79
    %vm81 = vcmask 261312
    %82 = vst.msk [vmem:[#allocation0] sm:$0x1] %vm81, %v80
    %s83 = scalar_lea.vmem %s0, 2
    %v84 = vld [vmem:[%s83] sm:$0x1]
    %85 = vrot.lane.b32.xlu0 %v84, 16
    %v86 = vpop.permute.xlu0 %85
    %vm87 = vcmask 195712
    %88 = vst.msk [vmem:[#allocation0] sm:$0x1] %vm87, %v86
    %s89 = scalar_lea.vmem %s0, 1
    %v90 = vld [vmem:[%s89] sm:$0x1]
    %91 = vrot.lane.b32.xlu0 %v90, 8
    %v92 = vpop.permute.xlu0 %91
    %vm93 = vcmask 130112
    %94 = vst.msk [vmem:[#allocation0] sm:$0x1] %vm93, %v92
    %s96 = ssub.s32 2, 1
    %v97 = vld [vmem:[#allocation0] sm:%s96]
    %s99 = ssub.s32 2, 1
    %100 = vst [vmem:[%s1] sm:%s99] %v97

// kernel: tile.28
$region0: #{tile.28}
  #allocation0 [shape = 's32[1]{0}', space=sflag, size = 0x4, scoped, tag = 'scoped memory for tile.28']
  %s0 = inlined_call_operand.vmem [shape: f32[4], index: 0, kind: input, shape index: {}]
  %s1 = inlined_call_operand.vmem [shape: f32[16,4], index: 1, kind: output, shape index: {}]
  // Predicated region
  $region2: #{tile.28} parent=0 // pred_check
    _
  $region3: #{tile.28} parent=0 // pred_check_branch
    %3 = sbr.rel (0) target = $region5
  $region4: #{tile.28} parent=0 // pred_region
    _
  $region5: #{tile.28} parent=0 // pred_fallthru
    _
  %v4 = vld [vmem:[%s0] ss:$0 sm:$0xff]
  %5 = vst [vmem:[%s1] sm:$0xff] %v4
  %s6 = scalar_lea.vmem %s1, 8
  %7 = vst [vmem:[%s6] sm:$0xff] %v4

// kernel: tile.29
$region0: #{tile.29}
  %s0 = inlined_call_operand.vmem [shape: f32[16,4], index: 0, kind: input, shape index: {}]
  %s1 = inlined_call_operand.vmem [shape: f32[1,64], index: 1, kind: output, shape index: {}]
  $region1: #{tile.29} parent=0
    #allocation0 [shape = 'u8[4096]{0}', space=vmem, size = 0x1000, scoped, tag = 'scoped mem for output reshape']
    %v2 = vld [vmem:[%s0] sm:$0x1]
    %vm3 = vcmask 31744
    %4 = vst.msk [vmem:[#allocation0] sm:$0x1] %vm3, %v2
    %s5 = scalar_lea.vmem %s0, 15
    %v6 = vld [vmem:[%s5] sm:$0x1]
    %7 = vrot.lane.b32.xlu0 %v6, 60
    %v8 = vpop.permute.xlu0 %7
    %vm9 = vcmask 523744
    %10 = vst.msk [vmem:[#allocation0] sm:$0x1] %vm9, %v8
    %s11 = scalar_lea.vmem %s0, 14
    %v12 = vld [vmem:[%s11] sm:$0x1]
    %13 = vrot.lane.b32.xlu0 %v12, 56
    %v14 = vpop.permute.xlu0 %13
    %vm15 = vcmask 490944
    %16 = vst.msk [vmem:[#allocation0] sm:$0x1] %vm15, %v14
    %s17 = scalar_lea.vmem %s0, 13
    %v18 = vld [vmem:[%s17] sm:$0x1]
    %19 = vrot.lane.b32.xlu0 %v18, 52
    %v20 = vpop.permute.xlu0 %19
    %vm21 = vcmask 458144
    %22 = vst.msk [vmem:[#allocation0] sm:$0x1] %vm21, %v20
    %s23 = scalar_lea.vmem %s0, 12
    %v24 = vld [vmem:[%s23] sm:$0x1]
    %25 = vrot.lane.b32.xlu0 %v24, 48
    %v26 = vpop.permute.xlu0 %25
    %vm27 = vcmask 425344
    %28 = vst.msk [vmem:[#allocation0] sm:$0x1] %vm27, %v26
    %s29 = scalar_lea.vmem %s0, 11
    %v30 = vld [vmem:[%s29] sm:$0x1]
    %31 = vrot.lane.b32.xlu0 %v30, 44
    %v32 = vpop.permute.xlu0 %31
    %vm33 = vcmask 392544
    %34 = vst.msk [vmem:[#allocation0] sm:$0x1] %vm33, %v32
    %s35 = scalar_lea.vmem %s0, 10
    %v36 = vld [vmem:[%s35] sm:$0x1]
    %37 = vrot.lane.b32.xlu0 %v36, 40
    %v38 = vpop.permute.xlu0 %37
    %vm39 = vcmask 359744
    %40 = vst.msk [vmem:[#allocation0] sm:$0x1] %vm39, %v38
    %s41 = scalar_lea.vmem %s0, 9
    %v42 = vld [vmem:[%s41] sm:$0x1]
    %43 = vrot.lane.b32.xlu0 %v42, 36
    %v44 = vpop.permute.xlu0 %43
    %vm45 = vcmask 326944
    %46 = vst.msk [vmem:[#allocation0] sm:$0x1] %vm45, %v44
    %s47 = scalar_lea.vmem %s0, 8
    %v48 = vld [vmem:[%s47] sm:$0x1]
    %49 = vrot.lane.b32.xlu0 %v48, 32
    %v50 = vpop.permute.xlu0 %49
    %vm51 = vcmask 294144
    %52 = vst.msk [vmem:[#allocation0] sm:$0x1] %vm51, %v50
    %s53 = scalar_lea.vmem %s0, 7
    %v54 = vld [vmem:[%s53] sm:$0x1]
    %55 = vrot.lane.b32.xlu0 %v54, 28
    %v56 = vpop.permute.xlu0 %55
    %vm57 = vcmask 261344
    %58 = vst.msk [vmem:[#allocation0] sm:$0x1] %vm57, %v56
    %s59 = scalar_lea.vmem %s0, 6
    %v60 = vld [vmem:[%s59] sm:$0x1]
    %61 = vrot.lane.b32.xlu0 %v60, 24
    %v62 = vpop.permute.xlu0 %61
    %vm63 = vcmask 228544
    %64 = vst.msk [vmem:[#allocation0] sm:$0x1] %vm63, %v62
    %s65 = scalar_lea.vmem %s0, 5
    %v66 = vld [vmem:[%s65] sm:$0x1]
    %67 = vrot.lane.b32.xlu0 %v66, 20
    %v68 = vpop.permute.xlu0 %67
    %vm69 = vcmask 195744
    %70 = vst.msk [vmem:[#allocation0] sm:$0x1] %vm69, %v68
    %s71 = scalar_lea.vmem %s0, 4
    %v72 = vld [vmem:[%s71] sm:$0x1]
    %73 = vrot.lane.b32.xlu0 %v72, 16
    %v74 = vpop.permute.xlu0 %73
    %vm75 = vcmask 162944
    %76 = vst.msk [vmem:[#allocation0] sm:$0x1] %vm75, %v74
    %s77 = scalar_lea.vmem %s0, 3
    %v78 = vld [vmem:[%s77] sm:$0x1]
    %79 = vrot.lane.b32.xlu0 %v78, 12
    %v80 = vpop.permute.xlu0 %79
    %vm81 = vcmask 130144
    %82 = vst.msk [vmem:[#allocation0] sm:$0x1] %vm81, %v80
    %s83 = scalar_lea.vmem %s0, 2
    %v84 = vld [vmem:[%s83] sm:$0x1]
    %85 = vrot.lane.b32.xlu0 %v84, 8
    %v86 = vpop.permute.xlu0 %85
    %vm87 = vcmask 97344
    %88 = vst.msk [vmem:[#allocation0] sm:$0x1] %vm87, %v86
    %s89 = scalar_lea.vmem %s0, 1
    %v90 = vld [vmem:[%s89] sm:$0x1]
    %91 = vrot.lane.b32.xlu0 %v90, 4
    %v92 = vpop.permute.xlu0 %91
    %vm93 = vcmask 64544
    %94 = vst.msk [vmem:[#allocation0] sm:$0x1] %vm93, %v92
    %s96 = ssub.s32 2, 1
    %v97 = vld [vmem:[#allocation0] sm:%s96]
    %s99 = ssub.s32 2, 1
    %100 = vst [vmem:[%s1] sm:%s99] %v97

// kernel: gcam_block.1
$region0: #{gcam_block.1}
  #allocation0 [shape = 'u32[]', space=smem, size = 0x4, offset = 0x4, fixed_abs, tag = 'smem constant byte address 0x4 - core index']
  #allocation1 [shape = 'u32[72,128]{1,0:T(1,128)}', space=vmem, size = 0x9000, scoped, tag = 'internal scratch']
  #allocation2 [shape = 'f32[2,18,64]{2,1,0:T(8,128)}', space=vmem, size = 0x6000, scoped, tag = 'scratch operand']
  #allocation3 [shape = 'f32[2,18,128]{2,1,0:T(8,128)}', space=vmem, size = 0x6000, scoped, tag = 'scratch operand']
  %s0 = inlined_call_operand.vmem [shape: f32[2,16,64], index: 0, kind: input, shape index: {}]
  %s1 = inlined_call_operand.vmem [shape: bf16[3,64,128], index: 1, kind: input, shape index: {}]
  %s2 = inlined_call_operand.vmem [shape: f32[1,128], index: 2, kind: input, shape index: {}]
  %s3 = inlined_call_operand.vmem [shape: bf16[3,128,128], index: 3, kind: input, shape index: {}]
  %s4 = inlined_call_operand.vmem [shape: f32[1,128], index: 4, kind: input, shape index: {}]
  %s5 = inlined_call_operand.vmem [shape: bf16[3,128,64], index: 5, kind: input, shape index: {}]
  %s6 = inlined_call_operand.vmem [shape: f32[1,64], index: 6, kind: input, shape index: {}]
  %s7 = inlined_call_operand.vmem [shape: f32[1,8], index: 7, kind: input, shape index: {}]
  %s8 = inlined_call_operand.vmem [shape: f32[1,8], index: 8, kind: input, shape index: {}]
  %s9 = inlined_call_operand.vmem [shape: f32[128,8], index: 9, kind: input, shape index: {}]
  %s10 = inlined_call_operand.vmem [shape: f32[8,128], index: 10, kind: input, shape index: {}]
  %s11 = inlined_call_operand.vmem [shape: f32[2,16,64], index: 11, kind: output, shape index: {0}]
  %s12 = inlined_call_operand.hbm [shape: f32[2,8], index: 12, kind: output, shape index: {1}]
  %13 = xla_tuple %s11, %s12
  %s14 = sld [smem:[#allocation0]]
  $region62: #{gcam_block.1} parent=0
    _
  %s16 = ssub.s32 1, %s14
  %s17 = scalar_select 0, %s16, %s14
  $region1: #{gcam_block.1} parent=0
    #allocation4 [shape = 'u8[1024]{0}', space=vmem, size = 0x400, scoped, tag = 'output window, operand 1, single buffered']
    #allocation5 [shape = 's32[1]{0}', space=sflag, size = 0x4, scoped, tag = 'scoped memory for gcam_block.1']
    %18 = vsyncpa [#allocation5], 0
    // Predicated region
    $region2: #{gcam_block.1} parent=1 // pred_check
      _
    $region3: #{gcam_block.1} parent=1 // pred_check_branch
      %20 = sbr.rel (0) target = $region5
    $region4: #{gcam_block.1} parent=1 // pred_region
      _
    $region5: #{gcam_block.1} parent=1 // pred_fallthru
      _
    // Predicated region
    $region6: #{gcam_block.1} parent=1 // pred_check
      _
    $region7: #{gcam_block.1} parent=1 // pred_check_branch
      %22 = sbr.rel (0) target = $region9
    $region8: #{gcam_block.1} parent=1 // pred_region
      _
    $region9: #{gcam_block.1} parent=1 // pred_fallthru
      _
    // Predicated region
    $region10: #{gcam_block.1} parent=1 // pred_check
      _
    $region11: #{gcam_block.1} parent=1 // pred_check_branch
      %24 = sbr.rel (0) target = $region13
    $region12: #{gcam_block.1} parent=1 // pred_region
      _
    $region13: #{gcam_block.1} parent=1 // pred_fallthru
      _
    // Predicated region
    $region14: #{gcam_block.1} parent=1 // pred_check
      _
    $region15: #{gcam_block.1} parent=1 // pred_check_branch
      %26 = sbr.rel (0) target = $region17
    $region16: #{gcam_block.1} parent=1 // pred_region
      _
    $region17: #{gcam_block.1} parent=1 // pred_fallthru
      _
    // Predicated region
    $region18: #{gcam_block.1} parent=1 // pred_check
      _
    $region19: #{gcam_block.1} parent=1 // pred_check_branch
      %28 = sbr.rel (0) target = $region21
    $region20: #{gcam_block.1} parent=1 // pred_region
      _
    $region21: #{gcam_block.1} parent=1 // pred_fallthru
      _
    // Predicated region
    $region22: #{gcam_block.1} parent=1 // pred_check
      _
    $region23: #{gcam_block.1} parent=1 // pred_check_branch
      %30 = sbr.rel (0) target = $region25
    $region24: #{gcam_block.1} parent=1 // pred_region
      _
    $region25: #{gcam_block.1} parent=1 // pred_fallthru
      _
    // Predicated region
    $region26: #{gcam_block.1} parent=1 // pred_check
      _
    $region27: #{gcam_block.1} parent=1 // pred_check_branch
      %32 = sbr.rel (0) target = $region29
    $region28: #{gcam_block.1} parent=1 // pred_region
      _
    $region29: #{gcam_block.1} parent=1 // pred_fallthru
      _
    // Predicated region
    $region30: #{gcam_block.1} parent=1 // pred_check
      _
    $region31: #{gcam_block.1} parent=1 // pred_check_branch
      %34 = sbr.rel (0) target = $region33
    $region32: #{gcam_block.1} parent=1 // pred_region
      _
    $region33: #{gcam_block.1} parent=1 // pred_fallthru
      _
    // Predicated region
    $region34: #{gcam_block.1} parent=1 // pred_check
      _
    $region35: #{gcam_block.1} parent=1 // pred_check_branch
      %36 = sbr.rel (0) target = $region37
    $region36: #{gcam_block.1} parent=1 // pred_region
      _
    $region37: #{gcam_block.1} parent=1 // pred_fallthru
      _
    // Predicated region
    $region38: #{gcam_block.1} parent=1 // pred_check
      _
    $region39: #{gcam_block.1} parent=1 // pred_check_branch
      %38 = sbr.rel (0) target = $region41
    $region40: #{gcam_block.1} parent=1 // pred_region
      _
    $region41: #{gcam_block.1} parent=1 // pred_fallthru
      _
    // Predicated region
    $region42: #{gcam_block.1} parent=1 // pred_check
      _
    $region43: #{gcam_block.1} parent=1 // pred_check_branch
      %40 = sbr.rel (0) target = $region45
    $region44: #{gcam_block.1} parent=1 // pred_region
      _
    $region45: #{gcam_block.1} parent=1 // pred_fallthru
      _
    %vm42 = vcmask 516096
    %43 = vst.msk [vmem:[#allocation2] sm:$0x1] %vm42, 0.0
    %44 = vst.msk [vmem:[#allocation2 + $0x18] sm:$0x1] %vm42, 0.0
    %45 = vst.msk [vmem:[#allocation2 + $0x11] sm:$0x1] %vm42, 0.0
    %46 = vst.msk [vmem:[#allocation2 + $0x29] sm:$0x1] %vm42, 0.0
    %47 = vst [vmem:[#allocation3] sm:$0x1] 0.0
    %48 = vst [vmem:[#allocation3 + $0x18] sm:$0x1] 0.0
    %49 = vst [vmem:[#allocation3 + $0x11] sm:$0x1] 0.0
    %50 = vst [vmem:[#allocation3 + $0x29] sm:$0x1] 0.0
    %v51 = vld [vmem:[%s0] sm:$0xff]
    %v52 = vld [vmem:[%s0 + $0x8] sm:$0xff]
    %v53 = vld [vmem:[%s0 + $0x10] sm:$0xff]
    %v54 = vld [vmem:[%s0 + $0x18] sm:$0xff]
    %vm55 = vcmask 523264
    %56 = vst.msk [vmem:[#allocation2 + $0x1] sm:$0xff] %vm55, %v51
    %57 = vst.msk [vmem:[#allocation2 + $0x9] sm:$0xff] %vm55, %v52
    %58 = vst.msk [vmem:[#allocation2 + $0x19] sm:$0xff] %vm55, %v53
    %59 = vst.msk [vmem:[#allocation2 + $0x21] sm:$0xff] %vm55, %v54
    %v60 = vld [vmem:[%s2] sm:$0x1]
    %v61 = vld [vmem:[#allocation2] sm:$0xff]
    %v62 = vld [vmem:[#allocation2 + $0x8] sm:$0xff]
    %v63 = vld [vmem:[#allocation2 + $0x18] sm:$0xff]
    %v64 = vld [vmem:[#allocation2 + $0x20] sm:$0xff]
    %v65 = vpack.c.bf16 %v62, %v61
    %v66 = vpack.c.bf16 %v64, %v63
    %v67 = vld [vmem:[%s1] sm:$0xf]
    %v68 = vld [vmem:[%s1 + $0x4] sm:$0xf]
    %v69 = vld [vmem:[%s1 + $0x8] sm:$0xf]
    %v70 = vld [vmem:[%s1 + $0xc] sm:$0xf]
    %v71 = vld [vmem:[%s1 + $0x10] sm:$0xf]
    %v72 = vld [vmem:[%s1 + $0x14] sm:$0xf]
    %v73 = vld [vmem:[%s1 + $0x18] sm:$0xf]
    %v74 = vld [vmem:[%s1 + $0x1c] sm:$0xf]
    %v75 = vld [vmem:[#allocation2 + $0x1] sm:$0xff]
    %v76 = vld [vmem:[#allocation2 + $0x9] sm:$0xff]
    %v77 = vld [vmem:[#allocation2 + $0x19] sm:$0xff]
    %v78 = vld [vmem:[#allocation2 + $0x21] sm:$0xff]
    %v79 = vpack.c.bf16 %v76, %v75
    %v80 = vpack.c.bf16 %v78, %v77
    %s81 = scalar_lea.vmem %s1, 32
    %v82 = vld [vmem:[%s81] sm:$0xf]
    %v83 = vld [vmem:[%s81 + $0x4] sm:$0xf]
    %v84 = vld [vmem:[%s81 + $0x8] sm:$0xf]
    %v85 = vld [vmem:[%s81 + $0xc] sm:$0xf]
    %v86 = vld [vmem:[%s81 + $0x10] sm:$0xf]
    %v87 = vld [vmem:[%s81 + $0x14] sm:$0xf]
    %v88 = vld [vmem:[%s81 + $0x18] sm:$0xf]
    %v89 = vld [vmem:[%s81 + $0x1c] sm:$0xf]
    %v98 = vunpack.c.l.b16 %v82
    %v99 = vunpack.c.l.b16 %v83
    %v100 = vunpack.c.l.b16 %v84
    %v101 = vunpack.c.l.b16 %v85
    %v102 = vunpack.c.l.b16 %v86
    %v103 = vunpack.c.l.b16 %v87
    %v104 = vunpack.c.l.b16 %v88
    %v105 = vunpack.c.l.b16 %v89
    %v106 = vpack.c.b16 %v99, %v98
    %v107 = vpack.c.b16 %v101, %v100
    %v108 = vpack.c.b16 %v103, %v102
    %v109 = vpack.c.b16 %v105, %v104
    %v115 = vsel %vm55, %v79, 0
    %v118 = vsel %vm55, %v80, 0
    %120 = vmatpush.bf16.msra.mxu0 0
    %121 = vmatpush.bf16.msra.mxu0 0
    %122 = vmatpush.bf16.msra.mxu0 0
    %123 = vmatpush.bf16.msra.mxu0 0
    %124 = vmatpush.bf16.msra.mxu0 %v109
    %125 = vmatpush.bf16.msra.mxu0 %v108
    %126 = vmatpush.bf16.msra.mxu0 %v107
    %127 = vmatpush.bf16.msra.mxu0 %v106
    %128 = vmatmul.bf16.gmra.mxu0 %v115
    %v129 = vpop.f32.mrf.mxu0
    %v130 = vadd.f32 0.0, %v129
    %v131 = vpop.f32.mrf.mxu0
    %v132 = vadd.f32 0.0, %v131
    %133 = vmatmul.bf16.gmra.mxu0 %v118
    %v134 = vpop.f32.mrf.mxu0
    %v135 = vadd.f32 0.0, %v134
    %v136 = vpop.f32.mrf.mxu0
    %v137 = vadd.f32 0.0, %v136
    %138 = vdwg.mxu0
    %v147 = vunpack.c.l.b16 %v67
    %v148 = vunpack.c.l.b16 %v68
    %v149 = vunpack.c.l.b16 %v69
    %v150 = vunpack.c.l.b16 %v70
    %v151 = vunpack.c.l.b16 %v71
    %v152 = vunpack.c.l.b16 %v72
    %v153 = vunpack.c.l.b16 %v73
    %v154 = vunpack.c.l.b16 %v74
    %v155 = vpack.c.b16 %v148, %v147
    %v156 = vpack.c.b16 %v150, %v149
    %v157 = vpack.c.b16 %v152, %v151
    %v158 = vpack.c.b16 %v154, %v153
    %v164 = vsel %vm55, %v65, 0
    %v167 = vsel %vm55, %v66, 0
    %169 = vmatpush.bf16.msra.mxu0 0
    %170 = vmatpush.bf16.msra.mxu0 0
    %171 = vmatpush.bf16.msra.mxu0 0
    %172 = vmatpush.bf16.msra.mxu0 0
    %173 = vmatpush.bf16.msra.mxu0 %v158
    %174 = vmatpush.bf16.msra.mxu0 %v157
    %175 = vmatpush.bf16.msra.mxu0 %v156
    %176 = vmatpush.bf16.msra.mxu0 %v155
    %177 = vmatmul.bf16.gmra.mxu0 %v164
    %v178 = vpop.f32.mrf.mxu0
    %v179 = vadd.f32 %v130, %v178
    %v180 = vpop.f32.mrf.mxu0
    %v181 = vadd.f32 %v132, %v180
    %182 = vmatmul.bf16.gmra.mxu0 %v167
    %v183 = vpop.f32.mrf.mxu0
    %v184 = vadd.f32 %v135, %v183
    %v185 = vpop.f32.mrf.mxu0
    %v186 = vadd.f32 %v137, %v185
    %187 = vdwg.mxu0
    %v188 = vld [vmem:[#allocation2 + $0x2] sm:$0xff]
    %v189 = vld [vmem:[#allocation2 + $0xa] sm:$0xff]
    %v190 = vld [vmem:[#allocation2 + $0x1a] sm:$0xff]
    %v191 = vld [vmem:[#allocation2 + $0x22] sm:$0xff]
    %v192 = vpack.c.bf16 %v189, %v188
    %v193 = vpack.c.bf16 %v191, %v190
    %s194 = scalar_lea.vmem %s1, 64
    %v195 = vld [vmem:[%s194] sm:$0xf]
    %v196 = vld [vmem:[%s194 + $0x4] sm:$0xf]
    %v197 = vld [vmem:[%s194 + $0x8] sm:$0xf]
    %v198 = vld [vmem:[%s194 + $0xc] sm:$0xf]
    %v199 = vld [vmem:[%s194 + $0x10] sm:$0xf]
    %v200 = vld [vmem:[%s194 + $0x14] sm:$0xf]
    %v201 = vld [vmem:[%s194 + $0x18] sm:$0xf]
    %v202 = vld [vmem:[%s194 + $0x1c] sm:$0xf]
    %v211 = vunpack.c.l.b16 %v195
    %v212 = vunpack.c.l.b16 %v196
    %v213 = vunpack.c.l.b16 %v197
    %v214 = vunpack.c.l.b16 %v198
    %v215 = vunpack.c.l.b16 %v199
    %v216 = vunpack.c.l.b16 %v200
    %v217 = vunpack.c.l.b16 %v201
    %v218 = vunpack.c.l.b16 %v202
    %v219 = vpack.c.b16 %v212, %v211
    %v220 = vpack.c.b16 %v214, %v213
    %v221 = vpack.c.b16 %v216, %v215
    %v222 = vpack.c.b16 %v218, %v217
    %v228 = vsel %vm55, %v192, 0
    %v231 = vsel %vm55, %v193, 0
    %233 = vmatpush.bf16.msra.mxu0 0
    %234 = vmatpush.bf16.msra.mxu0 0
    %235 = vmatpush.bf16.msra.mxu0 0
    %236 = vmatpush.bf16.msra.mxu0 0
    %237 = vmatpush.bf16.msra.mxu0 %v222
    %238 = vmatpush.bf16.msra.mxu0 %v221
    %239 = vmatpush.bf16.msra.mxu0 %v220
    %240 = vmatpush.bf16.msra.mxu0 %v219
    %241 = vmatmul.bf16.gmra.mxu0 %v228
    %v242 = vpop.f32.mrf.mxu0
    %v243 = vadd.f32 0.0, %v242
    %v244 = vpop.f32.mrf.mxu0
    %v245 = vadd.f32 0.0, %v244
    %246 = vmatmul.bf16.gmra.mxu0 %v231
    %v247 = vpop.f32.mrf.mxu0
    %v248 = vadd.f32 0.0, %v247
    %v249 = vpop.f32.mrf.mxu0
    %v250 = vadd.f32 0.0, %v249
    %251 = vdwg.mxu0
    %v252 = vadd.f32 %v179, %v243
    %v253 = vadd.f32 %v181, %v245
    %v254 = vadd.f32 %v184, %v248
    %v255 = vadd.f32 %v186, %v250
    %v257 = vperm.slane %v60, 0
    %v259 = vadd.f32 %v252, %v257
    %v260 = vadd.f32 %v253, %v257
    %v261 = vadd.f32 %v254, %v257
    %v262 = vadd.f32 %v255, %v257
    %v263 = vmax.f32 %v259, 0.0
    %v264 = vmax.f32 %v260, 0.0
    %v265 = vmax.f32 %v261, 0.0
    %v266 = vmax.f32 %v262, 0.0
    %267 = vst [vmem:[#allocation3 + $0x1] sm:$0xff] %v263
    %268 = vst [vmem:[#allocation3 + $0x9] sm:$0xff] %v264
    %269 = vst [vmem:[#allocation3 + $0x19] sm:$0xff] %v265
    %270 = vst [vmem:[#allocation3 + $0x21] sm:$0xff] %v266
    %v271 = vld [vmem:[%s4] sm:$0x1]
    %v272 = vld [vmem:[#allocation3] sm:$0xff]
    %v273 = vld [vmem:[#allocation3 + $0x8] sm:$0xff]
    %v274 = vld [vmem:[#allocation3 + $0x18] sm:$0xff]
    %v275 = vld [vmem:[#allocation3 + $0x20] sm:$0xff]
    %v276 = vpack.c.bf16 %v273, %v272
    %v277 = vpack.c.bf16 %v275, %v274
    %v278 = vld [vmem:[%s3] sm:$0xf]
    %v279 = vld [vmem:[%s3 + $0x4] sm:$0xf]
    %v280 = vld [vmem:[%s3 + $0x8] sm:$0xf]
    %v281 = vld [vmem:[%s3 + $0xc] sm:$0xf]
    %v282 = vld [vmem:[%s3 + $0x10] sm:$0xf]
    %v283 = vld [vmem:[%s3 + $0x14] sm:$0xf]
    %v284 = vld [vmem:[%s3 + $0x18] sm:$0xf]
    %v285 = vld [vmem:[%s3 + $0x1c] sm:$0xf]
    %v286 = vld [vmem:[%s3 + $0x20] sm:$0xf]
    %v287 = vld [vmem:[%s3 + $0x24] sm:$0xf]
    %v288 = vld [vmem:[%s3 + $0x28] sm:$0xf]
    %v289 = vld [vmem:[%s3 + $0x2c] sm:$0xf]
    %v290 = vld [vmem:[%s3 + $0x30] sm:$0xf]
    %v291 = vld [vmem:[%s3 + $0x34] sm:$0xf]
    %v292 = vld [vmem:[%s3 + $0x38] sm:$0xf]
    %v293 = vld [vmem:[%s3 + $0x3c] sm:$0xf]
    %v294 = vld [vmem:[#allocation3 + $0x1] sm:$0xff]
    %v295 = vld [vmem:[#allocation3 + $0x9] sm:$0xff]
    %v296 = vld [vmem:[#allocation3 + $0x19] sm:$0xff]
    %v297 = vld [vmem:[#allocation3 + $0x21] sm:$0xff]
    %v298 = vpack.c.bf16 %v295, %v294
    %v299 = vpack.c.bf16 %v297, %v296
    %s300 = scalar_lea.vmem %s3, 64
    %v301 = vld [vmem:[%s300] sm:$0xf]
    %v302 = vld [vmem:[%s300 + $0x4] sm:$0xf]
    %v303 = vld [vmem:[%s300 + $0x8] sm:$0xf]
    %v304 = vld [vmem:[%s300 + $0xc] sm:$0xf]
    %v305 = vld [vmem:[%s300 + $0x10] sm:$0xf]
    %v306 = vld [vmem:[%s300 + $0x14] sm:$0xf]
    %v307 = vld [vmem:[%s300 + $0x18] sm:$0xf]
    %v308 = vld [vmem:[%s300 + $0x1c] sm:$0xf]
    %v309 = vld [vmem:[%s300 + $0x20] sm:$0xf]
    %v310 = vld [vmem:[%s300 + $0x24] sm:$0xf]
    %v311 = vld [vmem:[%s300 + $0x28] sm:$0xf]
    %v312 = vld [vmem:[%s300 + $0x2c] sm:$0xf]
    %v313 = vld [vmem:[%s300 + $0x30] sm:$0xf]
    %v314 = vld [vmem:[%s300 + $0x34] sm:$0xf]
    %v315 = vld [vmem:[%s300 + $0x38] sm:$0xf]
    %v316 = vld [vmem:[%s300 + $0x3c] sm:$0xf]
    %v333 = vunpack.c.l.b16 %v301
    %v334 = vunpack.c.l.b16 %v302
    %v335 = vunpack.c.l.b16 %v303
    %v336 = vunpack.c.l.b16 %v304
    %v337 = vunpack.c.l.b16 %v305
    %v338 = vunpack.c.l.b16 %v306
    %v339 = vunpack.c.l.b16 %v307
    %v340 = vunpack.c.l.b16 %v308
    %v341 = vunpack.c.l.b16 %v309
    %v342 = vunpack.c.l.b16 %v310
    %v343 = vunpack.c.l.b16 %v311
    %v344 = vunpack.c.l.b16 %v312
    %v345 = vunpack.c.l.b16 %v313
    %v346 = vunpack.c.l.b16 %v314
    %v347 = vunpack.c.l.b16 %v315
    %v348 = vunpack.c.l.b16 %v316
    %v349 = vpack.c.b16 %v334, %v333
    %v350 = vpack.c.b16 %v336, %v335
    %v351 = vpack.c.b16 %v338, %v337
    %v352 = vpack.c.b16 %v340, %v339
    %v353 = vpack.c.b16 %v342, %v341
    %v354 = vpack.c.b16 %v344, %v343
    %v355 = vpack.c.b16 %v346, %v345
    %v356 = vpack.c.b16 %v348, %v347
    %365 = vmatpush.bf16.msra.mxu0 %v356
    %366 = vmatpush.bf16.msra.mxu0 %v355
    %367 = vmatpush.bf16.msra.mxu0 %v354
    %368 = vmatpush.bf16.msra.mxu0 %v353
    %369 = vmatpush.bf16.msra.mxu0 %v352
    %370 = vmatpush.bf16.msra.mxu0 %v351
    %371 = vmatpush.bf16.msra.mxu0 %v350
    %372 = vmatpush.bf16.msra.mxu0 %v349
    %373 = vmatmul.bf16.gmra.mxu0 %v298
    %v374 = vpop.f32.mrf.mxu0
    %v375 = vadd.f32 0.0, %v374
    %v376 = vpop.f32.mrf.mxu0
    %v377 = vadd.f32 0.0, %v376
    %378 = vmatmul.bf16.gmra.mxu0 %v299
    %v379 = vpop.f32.mrf.mxu0
    %v380 = vadd.f32 0.0, %v379
    %v381 = vpop.f32.mrf.mxu0
    %v382 = vadd.f32 0.0, %v381
    %383 = vdwg.mxu0
    %v400 = vunpack.c.l.b16 %v278
    %v401 = vunpack.c.l.b16 %v279
    %v402 = vunpack.c.l.b16 %v280
    %v403 = vunpack.c.l.b16 %v281
    %v404 = vunpack.c.l.b16 %v282
    %v405 = vunpack.c.l.b16 %v283
    %v406 = vunpack.c.l.b16 %v284
    %v407 = vunpack.c.l.b16 %v285
    %v408 = vunpack.c.l.b16 %v286
    %v409 = vunpack.c.l.b16 %v287
    %v410 = vunpack.c.l.b16 %v288
    %v411 = vunpack.c.l.b16 %v289
    %v412 = vunpack.c.l.b16 %v290
    %v413 = vunpack.c.l.b16 %v291
    %v414 = vunpack.c.l.b16 %v292
    %v415 = vunpack.c.l.b16 %v293
    %v416 = vpack.c.b16 %v401, %v400
    %v417 = vpack.c.b16 %v403, %v402
    %v418 = vpack.c.b16 %v405, %v404
    %v419 = vpack.c.b16 %v407, %v406
    %v420 = vpack.c.b16 %v409, %v408
    %v421 = vpack.c.b16 %v411, %v410
    %v422 = vpack.c.b16 %v413, %v412
    %v423 = vpack.c.b16 %v415, %v414
    %432 = vmatpush.bf16.msra.mxu0 %v423
    %433 = vmatpush.bf16.msra.mxu0 %v422
    %434 = vmatpush.bf16.msra.mxu0 %v421
    %435 = vmatpush.bf16.msra.mxu0 %v420
    %436 = vmatpush.bf16.msra.mxu0 %v419
    %437 = vmatpush.bf16.msra.mxu0 %v418
    %438 = vmatpush.bf16.msra.mxu0 %v417
    %439 = vmatpush.bf16.msra.mxu0 %v416
    %440 = vmatmul.bf16.gmra.mxu0 %v276
    %v441 = vpop.f32.mrf.mxu0
    %v442 = vadd.f32 %v375, %v441
    %v443 = vpop.f32.mrf.mxu0
    %v444 = vadd.f32 %v377, %v443
    %445 = vmatmul.bf16.gmra.mxu0 %v277
    %v446 = vpop.f32.mrf.mxu0
    %v447 = vadd.f32 %v380, %v446
    %v448 = vpop.f32.mrf.mxu0
    %v449 = vadd.f32 %v382, %v448
    %450 = vdwg.mxu0
    %v451 = vld [vmem:[#allocation3 + $0x2] sm:$0xff]
    %v452 = vld [vmem:[#allocation3 + $0xa] sm:$0xff]
    %v453 = vld [vmem:[#allocation3 + $0x1a] sm:$0xff]
    %v454 = vld [vmem:[#allocation3 + $0x22] sm:$0xff]
    %v455 = vpack.c.bf16 %v452, %v451
    %v456 = vpack.c.bf16 %v454, %v453
    %s457 = scalar_lea.vmem %s3, 128
    %v458 = vld [vmem:[%s457] sm:$0xf]
    %v459 = vld [vmem:[%s457 + $0x4] sm:$0xf]
    %v460 = vld [vmem:[%s457 + $0x8] sm:$0xf]
    %v461 = vld [vmem:[%s457 + $0xc] sm:$0xf]
    %v462 = vld [vmem:[%s457 + $0x10] sm:$0xf]
    %v463 = vld [vmem:[%s457 + $0x14] sm:$0xf]
    %v464 = vld [vmem:[%s457 + $0x18] sm:$0xf]
    %v465 = vld [vmem:[%s457 + $0x1c] sm:$0xf]
    %v466 = vld [vmem:[%s457 + $0x20] sm:$0xf]
    %v467 = vld [vmem:[%s457 + $0x24] sm:$0xf]
    %v468 = vld [vmem:[%s457 + $0x28] sm:$0xf]
    %v469 = vld [vmem:[%s457 + $0x2c] sm:$0xf]
    %v470 = vld [vmem:[%s457 + $0x30] sm:$0xf]
    %v471 = vld [vmem:[%s457 + $0x34] sm:$0xf]
    %v472 = vld [vmem:[%s457 + $0x38] sm:$0xf]
    %v473 = vld [vmem:[%s457 + $0x3c] sm:$0xf]
    %v490 = vunpack.c.l.b16 %v458
    %v491 = vunpack.c.l.b16 %v459
    %v492 = vunpack.c.l.b16 %v460
    %v493 = vunpack.c.l.b16 %v461
    %v494 = vunpack.c.l.b16 %v462
    %v495 = vunpack.c.l.b16 %v463
    %v496 = vunpack.c.l.b16 %v464
    %v497 = vunpack.c.l.b16 %v465
    %v498 = vunpack.c.l.b16 %v466
    %v499 = vunpack.c.l.b16 %v467
    %v500 = vunpack.c.l.b16 %v468
    %v501 = vunpack.c.l.b16 %v469
    %v502 = vunpack.c.l.b16 %v470
    %v503 = vunpack.c.l.b16 %v471
    %v504 = vunpack.c.l.b16 %v472
    %v505 = vunpack.c.l.b16 %v473
    %v506 = vpack.c.b16 %v491, %v490
    %v507 = vpack.c.b16 %v493, %v492
    %v508 = vpack.c.b16 %v495, %v494
    %v509 = vpack.c.b16 %v497, %v496
    %v510 = vpack.c.b16 %v499, %v498
    %v511 = vpack.c.b16 %v501, %v500
    %v512 = vpack.c.b16 %v503, %v502
    %v513 = vpack.c.b16 %v505, %v504
    %522 = vmatpush.bf16.msra.mxu0 %v513
    %523 = vmatpush.bf16.msra.mxu0 %v512
    %524 = vmatpush.bf16.msra.mxu0 %v511
    %525 = vmatpush.bf16.msra.mxu0 %v510
    %526 = vmatpush.bf16.msra.mxu0 %v509
    %527 = vmatpush.bf16.msra.mxu0 %v508
    %528 = vmatpush.bf16.msra.mxu0 %v507
    %529 = vmatpush.bf16.msra.mxu0 %v506
    %530 = vmatmul.bf16.gmra.mxu0 %v455
    %v531 = vpop.f32.mrf.mxu0
    %v532 = vadd.f32 0.0, %v531
    %v533 = vpop.f32.mrf.mxu0
    %v534 = vadd.f32 0.0, %v533
    %535 = vmatmul.bf16.gmra.mxu0 %v456
    %v536 = vpop.f32.mrf.mxu0
    %v537 = vadd.f32 0.0, %v536
    %v538 = vpop.f32.mrf.mxu0
    %v539 = vadd.f32 0.0, %v538
    %540 = vdwg.mxu0
    %v541 = vadd.f32 %v442, %v532
    %v542 = vadd.f32 %v444, %v534
    %v543 = vadd.f32 %v447, %v537
    %v544 = vadd.f32 %v449, %v539
    %v546 = vperm.slane %v271, 0
    %v548 = vadd.f32 %v541, %v546
    %v549 = vadd.f32 %v542, %v546
    %v550 = vadd.f32 %v543, %v546
    %v551 = vadd.f32 %v544, %v546
    %v552 = vmax.f32 %v548, 0.0
    %v553 = vmax.f32 %v549, 0.0
    %v554 = vmax.f32 %v550, 0.0
    %v555 = vmax.f32 %v551, 0.0
    %v556 = vadd.f32 %v552, %v553
    %v557 = vrot.slane %v556, 4
    %v558 = vadd.f32 %v556, %v557
    %v559 = vrot.slane %v558, 2
    %v560 = vadd.f32 %v558, %v559
    %v561 = vrot.slane %v560, 1
    %v562 = vadd.f32 %v560, %v561
    %v563 = vadd.f32 %v554, %v555
    %v564 = vrot.slane %v563, 4
    %v565 = vadd.f32 %v563, %v564
    %v566 = vrot.slane %v565, 2
    %v567 = vadd.f32 %v565, %v566
    %v568 = vrot.slane %v567, 1
    %v569 = vadd.f32 %v567, %v568
    %v570 = vld [vmem:[%s9] sm:$0xff]
    %v571 = vld [vmem:[%s9 + $0x8] sm:$0xff]
    %v572 = vld [vmem:[%s9 + $0x10] sm:$0xff]
    %v573 = vld [vmem:[%s9 + $0x18] sm:$0xff]
    %v574 = vld [vmem:[%s9 + $0x20] sm:$0xff]
    %v575 = vld [vmem:[%s9 + $0x28] sm:$0xff]
    %v576 = vld [vmem:[%s9 + $0x30] sm:$0xff]
    %v577 = vld [vmem:[%s9 + $0x38] sm:$0xff]
    %v578 = vld [vmem:[%s9 + $0x40] sm:$0xff]
    %v579 = vld [vmem:[%s9 + $0x48] sm:$0xff]
    %v580 = vld [vmem:[%s9 + $0x50] sm:$0xff]
    %v581 = vld [vmem:[%s9 + $0x58] sm:$0xff]
    %v582 = vld [vmem:[%s9 + $0x60] sm:$0xff]
    %v583 = vld [vmem:[%s9 + $0x68] sm:$0xff]
    %v584 = vld [vmem:[%s9 + $0x70] sm:$0xff]
    %v585 = vld [vmem:[%s9 + $0x78] sm:$0xff]
    %vm588 = vcmask 1041409
    %v589 = vsel %vm588, %v569, %v562
    %591 = vmatpush.msra.mxu0 %v585
    %592 = vmatpush.msra.mxu0 %v584
    %593 = vmatpush.msra.mxu0 %v583
    %594 = vmatpush.msra.mxu0 %v582
    %595 = vmatpush.msra.mxu0 %v581
    %596 = vmatpush.msra.mxu0 %v580
    %597 = vmatpush.msra.mxu0 %v579
    %598 = vmatpush.msra.mxu0 %v578
    %599 = vmatpush.msra.mxu0 %v577
    %600 = vmatpush.msra.mxu0 %v576
    %601 = vmatpush.msra.mxu0 %v575
    %602 = vmatpush.msra.mxu0 %v574
    %603 = vmatpush.msra.mxu0 %v573
    %604 = vmatpush.msra.mxu0 %v572
    %605 = vmatpush.msra.mxu0 %v571
    %606 = vmatpush.msra.mxu0 %v570
    %607 = vmatmul.f32.gmra.mxu0 %v589
    %v608 = vpop.f32.mrf.mxu0
    %v609 = vadd.f32 0.0, %v608
    %610 = vdwg.mxu0
    %v611 = vmul.f32 %v609, 0.00390625
    %vm612 = vcmask 58368
    %v613 = vsel %vm612, %v611, -inf
    %v614 = vrot.slane %v613, 4
    %v615 = vmax.f32 %v613, %v614
    %v616 = vrot.slane %v615, 2
    %v617 = vmax.f32 %v615, %v616
    %v618 = vrot.slane %v617, 1
    %v619 = vmax.f32 %v617, %v618
    %v620 = vsub.f32 %v611, %v619
    %v621 = vmul.f32 %v620, 1.442695
    %v622 = vpow.pop %v621
    %v623 = vsel %vm612, %v622, 0.0
    %v624 = vrot.slane %v623, 4
    %v625 = vadd.f32 %v623, %v624
    %v626 = vrot.slane %v625, 2
    %v627 = vadd.f32 %v625, %v626
    %v628 = vrot.slane %v627, 1
    %v629 = vadd.f32 %v627, %v628
    %v630 = vrcp.pop %v629
    %v631 = vmul.f32 %v622, %v630
    %v632 = vld [vmem:[%s7] sm:$0x1]
    %v634 = vperm.slane %v632, 0
    %v636 = vmul.f32 %v634, %v631
    %v637 = vld [vmem:[%s8] sm:$0x1]
    %v639 = vperm.slane %v637, 0
    %v641 = vadd.f32 %v636, %v639
    %v642 = vtanh.pop %v641
    %643 = vst.msk [vmem:[#allocation4] sm:$0x3] %vm612, %v642
    %v644 = vld [vmem:[%s10] sm:$0xff]
    %vm645 = vcmask 64512
    %v647 = vsel %vm645, %v642, 0
    %649 = vmatpush.msra.mxu0 0.0
    %650 = vmatpush.msra.mxu0 0.0
    %651 = vmatpush.msra.mxu0 0.0
    %652 = vmatpush.msra.mxu0 0.0
    %653 = vmatpush.msra.mxu0 0.0
    %654 = vmatpush.msra.mxu0 0.0
    %655 = vmatpush.msra.mxu0 0.0
    %656 = vmatpush.msra.mxu0 0.0
    %657 = vmatpush.msra.mxu0 0.0
    %658 = vmatpush.msra.mxu0 0.0
    %659 = vmatpush.msra.mxu0 0.0
    %660 = vmatpush.msra.mxu0 0.0
    %661 = vmatpush.msra.mxu0 0.0
    %662 = vmatpush.msra.mxu0 0.0
    %663 = vmatpush.msra.mxu0 0.0
    %664 = vmatpush.msra.mxu0 %v644
    %665 = vmatmul.f32.gmra.mxu0 %v647
    %v666 = vpop.f32.mrf.mxu0
    %v667 = vadd.f32 0.0, %v666
    %668 = vdwg.mxu0
    %v670 = vrot.slane %v667, 1
    %v672 = vadd.f32 %v667, 1.0
    %v673 = vadd.f32 %v670, 1.0
    %v676 = vperm.slane %v672, 0
    %v677 = vperm.slane %v673, 0
    %v680 = vmul.f32 %v552, %v676
    %v681 = vmul.f32 %v553, %v676
    %v682 = vmul.f32 %v554, %v677
    %v683 = vmul.f32 %v555, %v677
    %684 = vst [vmem:[#allocation3 + $0x1] sm:$0xff] %v680
    %685 = vst [vmem:[#allocation3 + $0x9] sm:$0xff] %v681
    %686 = vst [vmem:[#allocation3 + $0x19] sm:$0xff] %v682
    %687 = vst [vmem:[#allocation3 + $0x21] sm:$0xff] %v683
    %v688 = vld [vmem:[%s6] sm:$0x1]
    %v689 = vld [vmem:[#allocation3] sm:$0xff]
    %v690 = vld [vmem:[#allocation3 + $0x8] sm:$0xff]
    %v691 = vld [vmem:[#allocation3 + $0x18] sm:$0xff]
    %v692 = vld [vmem:[#allocation3 + $0x20] sm:$0xff]
    %v693 = vpack.c.bf16 %v690, %v689
    %v694 = vpack.c.bf16 %v692, %v691
    %v695 = vld [vmem:[%s5] sm:$0xf]
    %v696 = vld [vmem:[%s5 + $0x4] sm:$0xf]
    %v697 = vld [vmem:[%s5 + $0x8] sm:$0xf]
    %v698 = vld [vmem:[%s5 + $0xc] sm:$0xf]
    %v699 = vld [vmem:[%s5 + $0x10] sm:$0xf]
    %v700 = vld [vmem:[%s5 + $0x14] sm:$0xf]
    %v701 = vld [vmem:[%s5 + $0x18] sm:$0xf]
    %v702 = vld [vmem:[%s5 + $0x1c] sm:$0xf]
    %v703 = vld [vmem:[%s5 + $0x20] sm:$0xf]
    %v704 = vld [vmem:[%s5 + $0x24] sm:$0xf]
    %v705 = vld [vmem:[%s5 + $0x28] sm:$0xf]
    %v706 = vld [vmem:[%s5 + $0x2c] sm:$0xf]
    %v707 = vld [vmem:[%s5 + $0x30] sm:$0xf]
    %v708 = vld [vmem:[%s5 + $0x34] sm:$0xf]
    %v709 = vld [vmem:[%s5 + $0x38] sm:$0xf]
    %v710 = vld [vmem:[%s5 + $0x3c] sm:$0xf]
    %v711 = vld [vmem:[#allocation3 + $0x1] sm:$0xff]
    %v712 = vld [vmem:[#allocation3 + $0x9] sm:$0xff]
    %v713 = vld [vmem:[#allocation3 + $0x19] sm:$0xff]
    %v714 = vld [vmem:[#allocation3 + $0x21] sm:$0xff]
    %v715 = vpack.c.bf16 %v712, %v711
    %v716 = vpack.c.bf16 %v714, %v713
    %s717 = scalar_lea.vmem %s5, 64
    %v718 = vld [vmem:[%s717] sm:$0xf]
    %v719 = vld [vmem:[%s717 + $0x4] sm:$0xf]
    %v720 = vld [vmem:[%s717 + $0x8] sm:$0xf]
    %v721 = vld [vmem:[%s717 + $0xc] sm:$0xf]
    %v722 = vld [vmem:[%s717 + $0x10] sm:$0xf]
    %v723 = vld [vmem:[%s717 + $0x14] sm:$0xf]
    %v724 = vld [vmem:[%s717 + $0x18] sm:$0xf]
    %v725 = vld [vmem:[%s717 + $0x1c] sm:$0xf]
    %v726 = vld [vmem:[%s717 + $0x20] sm:$0xf]
    %v727 = vld [vmem:[%s717 + $0x24] sm:$0xf]
    %v728 = vld [vmem:[%s717 + $0x28] sm:$0xf]
    %v729 = vld [vmem:[%s717 + $0x2c] sm:$0xf]
    %v730 = vld [vmem:[%s717 + $0x30] sm:$0xf]
    %v731 = vld [vmem:[%s717 + $0x34] sm:$0xf]
    %v732 = vld [vmem:[%s717 + $0x38] sm:$0xf]
    %v733 = vld [vmem:[%s717 + $0x3c] sm:$0xf]
    %v750 = vunpack.c.l.b16 %v718
    %v751 = vunpack.c.l.b16 %v719
    %v752 = vunpack.c.l.b16 %v720
    %v753 = vunpack.c.l.b16 %v721
    %v754 = vunpack.c.l.b16 %v722
    %v755 = vunpack.c.l.b16 %v723
    %v756 = vunpack.c.l.b16 %v724
    %v757 = vunpack.c.l.b16 %v725
    %v758 = vunpack.c.l.b16 %v726
    %v759 = vunpack.c.l.b16 %v727
    %v760 = vunpack.c.l.b16 %v728
    %v761 = vunpack.c.l.b16 %v729
    %v762 = vunpack.c.l.b16 %v730
    %v763 = vunpack.c.l.b16 %v731
    %v764 = vunpack.c.l.b16 %v732
    %v765 = vunpack.c.l.b16 %v733
    %v766 = vpack.c.b16 %v751, %v750
    %v767 = vpack.c.b16 %v753, %v752
    %v768 = vpack.c.b16 %v755, %v754
    %v769 = vpack.c.b16 %v757, %v756
    %v770 = vpack.c.b16 %v759, %v758
    %v771 = vpack.c.b16 %v761, %v760
    %v772 = vpack.c.b16 %v763, %v762
    %v773 = vpack.c.b16 %v765, %v764
    %782 = vmatpush.bf16.msra.mxu0 %v773
    %783 = vmatpush.bf16.msra.mxu0 %v772
    %784 = vmatpush.bf16.msra.mxu0 %v771
    %785 = vmatpush.bf16.msra.mxu0 %v770
    %786 = vmatpush.bf16.msra.mxu0 %v769
    %787 = vmatpush.bf16.msra.mxu0 %v768
    %788 = vmatpush.bf16.msra.mxu0 %v767
    %789 = vmatpush.bf16.msra.mxu0 %v766
    %790 = vmatmul.bf16.gmra.mxu0 %v715
    %v791 = vpop.f32.mrf.mxu0
    %v792 = vadd.f32 0.0, %v791
    %v793 = vpop.f32.mrf.mxu0
    %v794 = vadd.f32 0.0, %v793
    %795 = vmatmul.bf16.gmra.mxu0 %v716
    %v796 = vpop.f32.mrf.mxu0
    %v797 = vadd.f32 0.0, %v796
    %v798 = vpop.f32.mrf.mxu0
    %v799 = vadd.f32 0.0, %v798
    %800 = vdwg.mxu0
    %v817 = vunpack.c.l.b16 %v695
    %v818 = vunpack.c.l.b16 %v696
    %v819 = vunpack.c.l.b16 %v697
    %v820 = vunpack.c.l.b16 %v698
    %v821 = vunpack.c.l.b16 %v699
    %v822 = vunpack.c.l.b16 %v700
    %v823 = vunpack.c.l.b16 %v701
    %v824 = vunpack.c.l.b16 %v702
    %v825 = vunpack.c.l.b16 %v703
    %v826 = vunpack.c.l.b16 %v704
    %v827 = vunpack.c.l.b16 %v705
    %v828 = vunpack.c.l.b16 %v706
    %v829 = vunpack.c.l.b16 %v707
    %v830 = vunpack.c.l.b16 %v708
    %v831 = vunpack.c.l.b16 %v709
    %v832 = vunpack.c.l.b16 %v710
    %v833 = vpack.c.b16 %v818, %v817
    %v834 = vpack.c.b16 %v820, %v819
    %v835 = vpack.c.b16 %v822, %v821
    %v836 = vpack.c.b16 %v824, %v823
    %v837 = vpack.c.b16 %v826, %v825
    %v838 = vpack.c.b16 %v828, %v827
    %v839 = vpack.c.b16 %v830, %v829
    %v840 = vpack.c.b16 %v832, %v831
    %849 = vmatpush.bf16.msra.mxu0 %v840
    %850 = vmatpush.bf16.msra.mxu0 %v839
    %851 = vmatpush.bf16.msra.mxu0 %v838
    %852 = vmatpush.bf16.msra.mxu0 %v837
    %853 = vmatpush.bf16.msra.mxu0 %v836
    %854 = vmatpush.bf16.msra.mxu0 %v835
    %855 = vmatpush.bf16.msra.mxu0 %v834
    %856 = vmatpush.bf16.msra.mxu0 %v833
    %857 = vmatmul.bf16.gmra.mxu0 %v693
    %v858 = vpop.f32.mrf.mxu0
    %v859 = vadd.f32 %v792, %v858
    %v860 = vpop.f32.mrf.mxu0
    %v861 = vadd.f32 %v794, %v860
    %862 = vmatmul.bf16.gmra.mxu0 %v694
    %v863 = vpop.f32.mrf.mxu0
    %v864 = vadd.f32 %v797, %v863
    %v865 = vpop.f32.mrf.mxu0
    %v866 = vadd.f32 %v799, %v865
    %867 = vdwg.mxu0
    %v868 = vld [vmem:[#allocation3 + $0x2] sm:$0xff]
    %v869 = vld [vmem:[#allocation3 + $0xa] sm:$0xff]
    %v870 = vld [vmem:[#allocation3 + $0x1a] sm:$0xff]
    %v871 = vld [vmem:[#allocation3 + $0x22] sm:$0xff]
    %v872 = vpack.c.bf16 %v869, %v868
    %v873 = vpack.c.bf16 %v871, %v870
    %s874 = scalar_lea.vmem %s5, 128
    %v875 = vld [vmem:[%s874] sm:$0xf]
    %v876 = vld [vmem:[%s874 + $0x4] sm:$0xf]
    %v877 = vld [vmem:[%s874 + $0x8] sm:$0xf]
    %v878 = vld [vmem:[%s874 + $0xc] sm:$0xf]
    %v879 = vld [vmem:[%s874 + $0x10] sm:$0xf]
    %v880 = vld [vmem:[%s874 + $0x14] sm:$0xf]
    %v881 = vld [vmem:[%s874 + $0x18] sm:$0xf]
    %v882 = vld [vmem:[%s874 + $0x1c] sm:$0xf]
    %v883 = vld [vmem:[%s874 + $0x20] sm:$0xf]
    %v884 = vld [vmem:[%s874 + $0x24] sm:$0xf]
    %v885 = vld [vmem:[%s874 + $0x28] sm:$0xf]
    %v886 = vld [vmem:[%s874 + $0x2c] sm:$0xf]
    %v887 = vld [vmem:[%s874 + $0x30] sm:$0xf]
    %v888 = vld [vmem:[%s874 + $0x34] sm:$0xf]
    %v889 = vld [vmem:[%s874 + $0x38] sm:$0xf]
    %v890 = vld [vmem:[%s874 + $0x3c] sm:$0xf]
    %v907 = vunpack.c.l.b16 %v875
    %v908 = vunpack.c.l.b16 %v876
    %v909 = vunpack.c.l.b16 %v877
    %v910 = vunpack.c.l.b16 %v878
    %v911 = vunpack.c.l.b16 %v879
    %v912 = vunpack.c.l.b16 %v880
    %v913 = vunpack.c.l.b16 %v881
    %v914 = vunpack.c.l.b16 %v882
    %v915 = vunpack.c.l.b16 %v883
    %v916 = vunpack.c.l.b16 %v884
    %v917 = vunpack.c.l.b16 %v885
    %v918 = vunpack.c.l.b16 %v886
    %v919 = vunpack.c.l.b16 %v887
    %v920 = vunpack.c.l.b16 %v888
    %v921 = vunpack.c.l.b16 %v889
    %v922 = vunpack.c.l.b16 %v890
    %v923 = vpack.c.b16 %v908, %v907
    %v924 = vpack.c.b16 %v910, %v909
    %v925 = vpack.c.b16 %v912, %v911
    %v926 = vpack.c.b16 %v914, %v913
    %v927 = vpack.c.b16 %v916, %v915
    %v928 = vpack.c.b16 %v918, %v917
    %v929 = vpack.c.b16 %v920, %v919
    %v930 = vpack.c.b16 %v922, %v921
    %939 = vmatpush.bf16.msra.mxu0 %v930
    %940 = vmatpush.bf16.msra.mxu0 %v929
    %941 = vmatpush.bf16.msra.mxu0 %v928
    %942 = vmatpush.bf16.msra.mxu0 %v927
    %943 = vmatpush.bf16.msra.mxu0 %v926
    %944 = vmatpush.bf16.msra.mxu0 %v925
    %945 = vmatpush.bf16.msra.mxu0 %v924
    %946 = vmatpush.bf16.msra.mxu0 %v923
    %947 = vmatmul.bf16.gmra.mxu0 %v872
    %v948 = vpop.f32.mrf.mxu0
    %v949 = vadd.f32 0.0, %v948
    %v950 = vpop.f32.mrf.mxu0
    %v951 = vadd.f32 0.0, %v950
    %952 = vmatmul.bf16.gmra.mxu0 %v873
    %v953 = vpop.f32.mrf.mxu0
    %v954 = vadd.f32 0.0, %v953
    %v955 = vpop.f32.mrf.mxu0
    %v956 = vadd.f32 0.0, %v955
    %957 = vdwg.mxu0
    %v958 = vadd.f32 %v859, %v949
    %v959 = vadd.f32 %v861, %v951
    %v960 = vadd.f32 %v864, %v954
    %v961 = vadd.f32 %v866, %v956
    %v963 = vperm.slane %v688, 0
    %v965 = vadd.f32 %v958, %v963
    %v966 = vadd.f32 %v959, %v963
    %v967 = vadd.f32 %v960, %v963
    %v968 = vadd.f32 %v961, %v963
    %v969 = vmax.f32 %v965, 0.0
    %v970 = vmax.f32 %v966, 0.0
    %v971 = vmax.f32 %v967, 0.0
    %v972 = vmax.f32 %v968, 0.0
    %v973 = vld [vmem:[%s0] sm:$0xff]
    %v974 = vld [vmem:[%s0 + $0x8] sm:$0xff]
    %v975 = vld [vmem:[%s0 + $0x10] sm:$0xff]
    %v976 = vld [vmem:[%s0 + $0x18] sm:$0xff]
    %v977 = vadd.f32 %v969, %v973
    %v978 = vadd.f32 %v970, %v974
    %v979 = vadd.f32 %v971, %v975
    %v980 = vadd.f32 %v972, %v976
    %981 = vst.msk [vmem:[%s11] sm:$0xff] %vm55, %v977
    %982 = vst.msk [vmem:[%s11 + $0x8] sm:$0xff] %vm55, %v978
    %983 = vst.msk [vmem:[%s11 + $0x10] sm:$0xff] %vm55, %v979
    %984 = vst.msk [vmem:[%s11 + $0x18] sm:$0xff] %vm55, %v980
    // Predicated region
    $region46: #{gcam_block.1} parent=1 // pred_check
      _
    $region47: #{gcam_block.1} parent=1 // pred_check_branch
      %986 = sbr.rel (0) target = $region49
    $region48: #{gcam_block.1} parent=1 // pred_region
      _
    $region49: #{gcam_block.1} parent=1 // pred_fallthru
      _
    // Predicated region
    $region50: #{gcam_block.1} parent=1 // pred_check
      _
    $region51: #{gcam_block.1} parent=1 // pred_check_branch
      %988 = sbr.rel (0) target = $region53
    $region52: #{gcam_block.1} parent=1 // pred_region
      %990 = vsyncadd [#allocation5], 0
      %s992 = sshll.u32 [#allocation4], 4
      %s993 = int_to_ptr.vmem [resolvable:$true] %s992
      %s994 = sshll.u32 %s12, 4
      %s995 = int_to_ptr.hbm [resolvable:$true] %s994
      %997 = dma.vmem_to_hbm [thread:$0]  %s993, 32, %s995, [#allocation5]
    $region53: #{gcam_block.1} parent=1 // pred_fallthru
      _
    // Predicated region
    $region54: #{gcam_block.1} parent=1 // pred_check
      _
    $region55: #{gcam_block.1} parent=1 // pred_check_branch
      %999 = sbr.rel (0) target = $region57
    $region56: #{gcam_block.1} parent=1 // pred_region
      _
    $region57: #{gcam_block.1} parent=1 // pred_fallthru
      _
    // Predicated region
    $region58: #{gcam_block.1} parent=1 // pred_check
      _
    $region59: #{gcam_block.1} parent=1 // pred_check_branch
      %1001 = sbr.rel (0) target = $region61
    $region60: #{gcam_block.1} parent=1 // pred_region
      %1003 = dma.done [#allocation5], 32
    $region61: #{gcam_block.1} parent=1 // pred_fallthru
      _
    %1004 = vsyncpa [#allocation5], 1

</llo_original>
